<compile_context>
chip_gen: v7x
topology: tpu7x:2x2x1
jax: 0.10.0
libtpu: 0.0.40
codegen_flags: <defaults>
</compile_context>

<pallas_src>
import functools
import math

import jax
import jax.numpy as jnp
from jax.experimental import pallas as pl
from jax.experimental.pallas import tpu as pltpu

D_IN = 28 * 28   # 784
H = 512
N_OUT = 10
N_PAD = 128      # logits padded to a full lane width for unmasked stores


def mlp_kernel(x_ref, w1_ref, b1_ref, w2_ref, b2_ref, w3_ref, b3_ref, o_ref, h_ref):
    # Layer 1: cast the f32 input tile to bf16 in-kernel (VPU, hidden under the MXU),
    # MXU matmul with f32 accumulation, bias + ReLU in f32, store bf16 activations.
    x = x_ref[...].astype(jnp.bfloat16)
    h1 = jnp.dot(x, w1_ref[...], preferred_element_type=jnp.float32)
    h_ref[...] = jnp.maximum(h1 + b1_ref[...], 0.0).astype(jnp.bfloat16)
    # Layer 2: reuse the same bf16 VMEM scratch (half the vld/vst traffic vs f32).
    h2 = jnp.dot(h_ref[...], w2_ref[...], preferred_element_type=jnp.float32)
    h_ref[...] = jnp.maximum(h2 + b2_ref[...], 0.0).astype(jnp.bfloat16)
    # Layer 3: output padded to 128 lanes (cols 10..127 of w3/b3 are zero).
    logits = jnp.dot(h_ref[...], w3_ref[...], preferred_element_type=jnp.float32)
    o_ref[...] = (logits + b3_ref[...]).astype(o_ref.dtype)


def _round_up(n, m):
    return ((n + m - 1) // m) * m


def prepare_kernel_params(params):
    """f32 (in,out)/(1,out) params -> bf16 weights, f32 biases, last layer padded to 128."""
    w1, b1, w2, b2, w3, b3 = params
    w3p = jnp.pad(w3, ((0, 0), (0, N_PAD - N_OUT)))
    b3p = jnp.pad(b3, ((0, 0), (0, N_PAD - N_OUT)))
    return (w1.astype(jnp.bfloat16), b1.astype(jnp.float32),
            w2.astype(jnp.bfloat16), b2.astype(jnp.float32),
            w3p.astype(jnp.bfloat16), b3p.astype(jnp.float32))


@functools.partial(jax.jit, static_argnames=("tile_b",))
def mnist_mlp_forward(x_nchw, kparams, tile_b=1024):
    """x_nchw: (B, 1, 28, 28) float32. Returns (B, 10) float32 logits."""
    w1, b1, w2, b2, w3, b3 = kparams
    B = x_nchw.shape[0]
    # nn.Flatten (row-major). Stays f32: the kernel casts per-tile, so the input is
    # read from HBM exactly once with no separate cast pass.
    x = x_nchw.reshape(B, D_IN)

    # Batch tile: multiple of 8 (sublane). For B >= 16 guarantee at least 2 tiles so a
    # 2-TensorCore chip (v7x) can shard the parallel batch axis across both cores.
    tb = min(tile_b, _round_up(B, 8))
    if B >= 16 and _round_up(B, tb) // tb < 2:
        tb = _round_up((tb + 1) // 2, 8)
    Bp = _round_up(B, tb)
    if Bp != B:
        x = jnp.pad(x, ((0, Bp - B), (0, 0)))

    resident = lambda shape: pl.BlockSpec(shape, lambda i: (0, 0))  # stays in VMEM

    out = pl.pallas_call(
        mlp_kernel,
        out_shape=jax.ShapeDtypeStruct((Bp, N_PAD), jnp.float32),
        grid=(Bp // tb,),
        in_specs=[
            pl.BlockSpec((tb, D_IN), lambda i: (i, 0)),   # batch-tiled f32 input stream
            resident((D_IN, H)), resident((1, H)),        # layer 1 weights/bias
            resident((H, H)), resident((1, H)),           # layer 2
            resident((H, N_PAD)), resident((1, N_PAD)),   # layer 3 (lane-padded)
        ],
        out_specs=pl.BlockSpec((tb, N_PAD), lambda i: (i, 0)),
        scratch_shapes=[pltpu.VMEM((tb, H), jnp.bfloat16)],  # bf16 hidden activations
        compiler_params=pltpu.CompilerParams(
            dimension_semantics=("parallel",),  # shard batch tiles across TCs where possible
        ),
    )(x, w1, b1, w2, b2, w3, b3)

    return out[:B, :N_OUT]


def init_params(key):
    """Deterministic init mimicking nn.Linear defaults (uniform +/- 1/sqrt(fan_in)).

    Weights returned as (in_features, out_features) f32; biases as (1, out_features) f32.
    """
    dims = [(D_IN, H), (H, H), (H, N_OUT)]
    params = []
    for fan_in, fan_out in dims:
        key, kw, kb = jax.random.split(key, 3)
        bound = 1.0 / math.sqrt(fan_in)
        w = jax.random.uniform(kw, (fan_in, fan_out), jnp.float32, -bound, bound)
        b = jax.random.uniform(kb, (1, fan_out), jnp.float32, -bound, bound)
        params += [w, b]
    return tuple(params)


def reference_forward(x_nchw, params):
    """Pure-JAX f32 reference matching the PyTorch module."""
    w1, b1, w2, b2, w3, b3 = params
    x = x_nchw.reshape(x_nchw.shape[0], -1)
    h1 = jnp.maximum(x @ w1 + b1, 0.0)
    h2 = jnp.maximum(h1 @ w2 + b2, 0.0)
    return h2 @ w3 + b3


if __name__ == "__main__":
    key = jax.random.PRNGKey(0)
    key, kx = jax.random.split(key)
    # Small MNIST-like batch: B=8, NCHW (8, 1, 28, 28)
    x = jax.random.normal(kx, (8, 1, 28, 28), dtype=jnp.float32)
    params = init_params(key)
    kparams = prepare_kernel_params(params)

    logits = mnist_mlp_forward(x, kparams)
    logits = jax.block_until_ready(logits)

    ref = reference_forward(x, params)
    assert logits.shape == (8, 10)
    # bf16 matmuls/activations with f32 accumulation: loose tolerance vs f32 reference.
    assert jnp.allclose(logits, ref, atol=3e-2, rtol=3e-2), (
        float(jnp.max(jnp.abs(logits - ref))))
    print("KERNEL_OK")
</pallas_src>

<mosaic_0001>
module attributes {stable_mosaic.version = 11 : i64} {
  func.func @mlp_kernel(%arg0: i32, %arg1: memref<8x784xf32, #tpu.memory_space<vmem>>, %arg2: memref<784x512xbf16, #tpu.memory_space<vmem>>, %arg3: memref<1x512xf32, #tpu.memory_space<vmem>>, %arg4: memref<512x512xbf16, #tpu.memory_space<vmem>>, %arg5: memref<1x512xf32, #tpu.memory_space<vmem>>, %arg6: memref<512x128xbf16, #tpu.memory_space<vmem>>, %arg7: memref<1x128xf32, #tpu.memory_space<vmem>>, %arg8: memref<8x128xf32, #tpu.memory_space<vmem>>, %arg9: memref<8x512xbf16, #tpu.memory_space<vmem>>) attributes {dimension_semantics = [#tpu.dimension_semantics<parallel>], iteration_bounds = array<i64: 1>, scalar_prefetch = 0 : i64, scratch_operands = 1 : i64, tpu.core_type = #tpu.core_type<tc>, window_params = [{transform_indices = @transform_0, window_bounds = array<i64: 8, 784>}, {pipeline_mode = #tpu.pipeline_mode<synchronous>, transform_indices = @transform_1, window_bounds = array<i64: 784, 512>}, {pipeline_mode = #tpu.pipeline_mode<synchronous>, transform_indices = @transform_2, window_bounds = array<i64: 1, 512>}, {pipeline_mode = #tpu.pipeline_mode<synchronous>, transform_indices = @transform_3, window_bounds = array<i64: 512, 512>}, {pipeline_mode = #tpu.pipeline_mode<synchronous>, transform_indices = @transform_4, window_bounds = array<i64: 1, 512>}, {pipeline_mode = #tpu.pipeline_mode<synchronous>, transform_indices = @transform_5, window_bounds = array<i64: 512, 128>}, {pipeline_mode = #tpu.pipeline_mode<synchronous>, transform_indices = @transform_6, window_bounds = array<i64: 1, 128>}, {transform_indices = @transform_7, window_bounds = array<i64: 8, 128>}]} {
    %c0 = arith.constant 0 : index
    %c0_0 = arith.constant 0 : index
    %0 = vector.load %arg1[%c0, %c0_0] : memref<8x784xf32, #tpu.memory_space<vmem>>, vector<8x784xf32>
    %1 = arith.truncf %0 : vector<8x784xf32> to vector<8x784xbf16>
    %c0_1 = arith.constant 0 : index
    %c0_2 = arith.constant 0 : index
    %2 = vector.load %arg2[%c0_1, %c0_2] : memref<784x512xbf16, #tpu.memory_space<vmem>>, vector<784x512xbf16>
    %cst = arith.constant dense<0.000000e+00> : vector<8x512xf32>
    %3 = tpu.matmul %1, %2, %cst {dimension_numbers = #tpu.dot_dimension_numbers<[1], [0], [0], [1], [0, 0, 1, 1], [], []>} : vector<8x784xbf16>, vector<784x512xbf16>, vector<8x512xf32> -> vector<8x512xf32>
    %c0_3 = arith.constant 0 : index
    %c0_4 = arith.constant 0 : index
    %4 = vector.load %arg3[%c0_3, %c0_4] : memref<1x512xf32, #tpu.memory_space<vmem>>, vector<1x512xf32>
    %5 = vector.broadcast %4 : vector<1x512xf32> to vector<8x512xf32>
    %6 = arith.addf %3, %5 : vector<8x512xf32>
    %cst_5 = arith.constant 0.000000e+00 : f32
    %7 = vector.broadcast %cst_5 : f32 to vector<8x512xf32>
    %8 = arith.maximumf %6, %7 : vector<8x512xf32>
    %9 = arith.truncf %8 : vector<8x512xf32> to vector<8x512xbf16>
    %c0_6 = arith.constant 0 : index
    %c0_7 = arith.constant 0 : index
    %10 = vector.load %arg9[%c0_6, %c0_7] : memref<8x512xbf16, #tpu.memory_space<vmem>>, vector<8x512xbf16>
    tpu.vector_store %arg9[%c0_6, %c0_7], %9 {strides = array<i32>} : memref<8x512xbf16, #tpu.memory_space<vmem>>, vector<8x512xbf16>,
    %c0_8 = arith.constant 0 : index
    %c0_9 = arith.constant 0 : index
    %11 = vector.load %arg9[%c0_8, %c0_9] : memref<8x512xbf16, #tpu.memory_space<vmem>>, vector<8x512xbf16>
    %c0_10 = arith.constant 0 : index
    %c0_11 = arith.constant 0 : index
    %12 = vector.load %arg4[%c0_10, %c0_11] : memref<512x512xbf16, #tpu.memory_space<vmem>>, vector<512x512xbf16>
    %cst_12 = arith.constant dense<0.000000e+00> : vector<8x512xf32>
    %13 = tpu.matmul %11, %12, %cst_12 {dimension_numbers = #tpu.dot_dimension_numbers<[1], [0], [0], [1], [0, 0, 1, 1], [], []>} : vector<8x512xbf16>, vector<512x512xbf16>, vector<8x512xf32> -> vector<8x512xf32>
    %c0_13 = arith.constant 0 : index
    %c0_14 = arith.constant 0 : index
    %14 = vector.load %arg5[%c0_13, %c0_14] : memref<1x512xf32, #tpu.memory_space<vmem>>, vector<1x512xf32>
    %15 = vector.broadcast %14 : vector<1x512xf32> to vector<8x512xf32>
    %16 = arith.addf %13, %15 : vector<8x512xf32>
    %cst_15 = arith.constant 0.000000e+00 : f32
    %17 = vector.broadcast %cst_15 : f32 to vector<8x512xf32>
    %18 = arith.maximumf %16, %17 : vector<8x512xf32>
    %19 = arith.truncf %18 : vector<8x512xf32> to vector<8x512xbf16>
    %c0_16 = arith.constant 0 : index
    %c0_17 = arith.constant 0 : index
    %20 = vector.load %arg9[%c0_16, %c0_17] : memref<8x512xbf16, #tpu.memory_space<vmem>>, vector<8x512xbf16>
    tpu.vector_store %arg9[%c0_16, %c0_17], %19 {strides = array<i32>} : memref<8x512xbf16, #tpu.memory_space<vmem>>, vector<8x512xbf16>,
    %c0_18 = arith.constant 0 : index
    %c0_19 = arith.constant 0 : index
    %21 = vector.load %arg9[%c0_18, %c0_19] : memref<8x512xbf16, #tpu.memory_space<vmem>>, vector<8x512xbf16>
    %c0_20 = arith.constant 0 : index
    %c0_21 = arith.constant 0 : index
    %22 = vector.load %arg6[%c0_20, %c0_21] : memref<512x128xbf16, #tpu.memory_space<vmem>>, vector<512x128xbf16>
    %cst_22 = arith.constant dense<0.000000e+00> : vector<8x128xf32>
    %23 = tpu.matmul %21, %22, %cst_22 {dimension_numbers = #tpu.dot_dimension_numbers<[1], [0], [0], [1], [0, 0, 1, 1], [], []>} : vector<8x512xbf16>, vector<512x128xbf16>, vector<8x128xf32> -> vector<8x128xf32>
    %c0_23 = arith.constant 0 : index
    %c0_24 = arith.constant 0 : index
    %24 = vector.load %arg7[%c0_23, %c0_24] : memref<1x128xf32, #tpu.memory_space<vmem>>, vector<1x128xf32>
    %25 = vector.broadcast %24 : vector<1x128xf32> to vector<8x128xf32>
    %26 = arith.addf %23, %25 : vector<8x128xf32>
    %c0_25 = arith.constant 0 : index
    %c0_26 = arith.constant 0 : index
    %27 = vector.load %arg8[%c0_25, %c0_26] : memref<8x128xf32, #tpu.memory_space<vmem>>, vector<8x128xf32>
    tpu.vector_store %arg8[%c0_25, %c0_26], %26 {strides = array<i32>} : memref<8x128xf32, #tpu.memory_space<vmem>>, vector<8x128xf32>,
    return
  }
  func.func @transform_0(%arg0: i32) -> (i32, i32) {
    %c0_i32 = arith.constant 0 : i32
    %c0_i32_0 = arith.constant 0 : i32
    return %arg0, %c0_i32 : i32, i32
  }
  func.func @transform_1(%arg0: i32) -> (i32, i32) {
    %c0_i32 = arith.constant 0 : i32
    %c0_i32_0 = arith.constant 0 : i32
    %c0_i32_1 = arith.constant 0 : i32
    return %c0_i32, %c0_i32_0 : i32, i32
  }
  func.func @transform_2(%arg0: i32) -> (i32, i32) {
    %c0_i32 = arith.constant 0 : i32
    %c0_i32_0 = arith.constant 0 : i32
    %c0_i32_1 = arith.constant 0 : i32
    return %c0_i32, %c0_i32_0 : i32, i32
  }
  func.func @transform_3(%arg0: i32) -> (i32, i32) {
    %c0_i32 = arith.constant 0 : i32
    %c0_i32_0 = arith.constant 0 : i32
    %c0_i32_1 = arith.constant 0 : i32
    return %c0_i32, %c0_i32_0 : i32, i32
  }
  func.func @transform_4(%arg0: i32) -> (i32, i32) {
    %c0_i32 = arith.constant 0 : i32
    %c0_i32_0 = arith.constant 0 : i32
    %c0_i32_1 = arith.constant 0 : i32
    return %c0_i32, %c0_i32_0 : i32, i32
  }
  func.func @transform_5(%arg0: i32) -> (i32, i32) {
    %c0_i32 = arith.constant 0 : i32
    %c0_i32_0 = arith.constant 0 : i32
    %c0_i32_1 = arith.constant 0 : i32
    return %c0_i32, %c0_i32_0 : i32, i32
  }
  func.func @transform_6(%arg0: i32) -> (i32, i32) {
    %c0_i32 = arith.constant 0 : i32
    %c0_i32_0 = arith.constant 0 : i32
    %c0_i32_1 = arith.constant 0 : i32
    return %c0_i32, %c0_i32_0 : i32, i32
  }
  func.func @transform_7(%arg0: i32) -> (i32, i32) {
    %c0_i32 = arith.constant 0 : i32
    %c0_i32_0 = arith.constant 0 : i32
    return %arg0, %c0_i32 : i32, i32
  }
}

</mosaic_0001>

<llo_original>
// kernel: mnist_mlp_forward.1
$region0: #{mnist_mlp_forward.1}
  #allocation0 [shape = 'u32[]', space=smem, size = 0x4, offset = 0x4, fixed_abs, tag = 'smem constant byte address 0x4 - core index']
  #allocation1 [shape = 'u32[144,128]{1,0:T(1,128)}', space=vmem, size = 0x12000, scoped, tag = 'internal scratch']
  #allocation2 [shape = 'bf16[8,512]{1,0:T(8,128)(2,1)}', space=vmem, size = 0x2000, scoped, tag = 'scratch operand']
  %s0 = inlined_call_operand.vmem [shape: f32[8,784], index: 0, kind: input, shape index: {}]
  %s1 = inlined_call_operand.hbm [shape: bf16[784,512], index: 1, kind: input, shape index: {}]
  %s2 = inlined_call_operand.vmem [shape: f32[1,512], index: 2, kind: input, shape index: {}]
  %s3 = inlined_call_operand.hbm [shape: bf16[512,512], index: 3, kind: input, shape index: {}]
  %s4 = inlined_call_operand.vmem [shape: f32[1,512], index: 4, kind: input, shape index: {}]
  %s5 = inlined_call_operand.vmem [shape: bf16[512,128], index: 5, kind: input, shape index: {}]
  %s6 = inlined_call_operand.vmem [shape: f32[1,128], index: 6, kind: input, shape index: {}]
  %s7 = inlined_call_operand.hbm [shape: f32[8,128], index: 7, kind: output, shape index: {}]
  %s8 = sld [smem:[#allocation0]]
  $region46: #{mnist_mlp_forward.1} parent=0
    _
  %s10 = ssub.s32 1, %s8
  %s11 = scalar_select 0, %s10, %s8
  $region1: #{mnist_mlp_forward.1} parent=0
    #allocation3 [shape = 'u8[802816]{0}', space=vmem, size = 0xc4000, scoped, tag = 'input window, operand 1, single buffered']
    #allocation4 [shape = 's32[1]{0}', space=sflag, size = 0x4, scoped, tag = 'scoped memory for mnist_mlp_forward.1']
    #allocation5 [shape = 's32[1]{0}', space=sflag, size = 0x4, scoped, tag = 'scoped memory for mnist_mlp_forward.1']
    #allocation6 [shape = 'u8[524288]{0}', space=vmem, size = 0x80000, scoped, tag = 'input window, operand 3, single buffered']
    #allocation7 [shape = 's32[1]{0}', space=sflag, size = 0x4, scoped, tag = 'scoped memory for mnist_mlp_forward.1']
    #allocation8 [shape = 'u8[4096]{0}', space=vmem, size = 0x1000, scoped, tag = 'output window, operand 0, single buffered']
    %12 = vsyncpa [#allocation4], 0
    %13 = vsyncpa [#allocation7], 0
    %14 = vsyncpa [#allocation5], 0
    // Predicated region
    $region2: #{mnist_mlp_forward.1} parent=1 // pred_check
      _
    $region3: #{mnist_mlp_forward.1} parent=1 // pred_check_branch
      %16 = sbr.rel (0) target = $region5
    $region4: #{mnist_mlp_forward.1} parent=1 // pred_region
      _
    $region5: #{mnist_mlp_forward.1} parent=1 // pred_fallthru
      _
    // Predicated region
    $region6: #{mnist_mlp_forward.1} parent=1 // pred_check
      _
    $region7: #{mnist_mlp_forward.1} parent=1 // pred_check_branch
      %18 = sbr.rel (0) target = $region9
    $region8: #{mnist_mlp_forward.1} parent=1 // pred_region
      %s20 = ssub.s32 25088, 25088
      %21 = vsyncadd [#allocation4], %s20
      %s22 = sshll.u32 [#allocation3], 4
      %s23 = int_to_ptr.vmem [resolvable:$true] %s22
      %28 = dma.hbm_to_vmem [thread:$0]  %s1, 25088, %s23, [#allocation4], 256, 256, 16
    $region9: #{mnist_mlp_forward.1} parent=1 // pred_fallthru
      _
    // Predicated region
    $region10: #{mnist_mlp_forward.1} parent=1 // pred_check
      _
    $region11: #{mnist_mlp_forward.1} parent=1 // pred_check_branch
      %30 = sbr.rel (0) target = $region13
    $region12: #{mnist_mlp_forward.1} parent=1 // pred_region
      _
    $region13: #{mnist_mlp_forward.1} parent=1 // pred_fallthru
      _
    // Predicated region
    $region14: #{mnist_mlp_forward.1} parent=1 // pred_check
      _
    $region15: #{mnist_mlp_forward.1} parent=1 // pred_check_branch
      %32 = sbr.rel (0) target = $region17
    $region16: #{mnist_mlp_forward.1} parent=1 // pred_region
      %s34 = ssub.s32 16384, 16384
      %35 = vsyncadd [#allocation7], %s34
      %s36 = sshll.u32 [#allocation6], 4
      %s37 = int_to_ptr.vmem [resolvable:$true] %s36
      %42 = dma.hbm_to_vmem [thread:$0]  %s3, 16384, %s37, [#allocation7], 256, 256, 16
    $region17: #{mnist_mlp_forward.1} parent=1 // pred_fallthru
      _
    // Predicated region
    $region18: #{mnist_mlp_forward.1} parent=1 // pred_check
      _
    $region19: #{mnist_mlp_forward.1} parent=1 // pred_check_branch
      %44 = sbr.rel (0) target = $region21
    $region20: #{mnist_mlp_forward.1} parent=1 // pred_region
      _
    $region21: #{mnist_mlp_forward.1} parent=1 // pred_fallthru
      _
    // Predicated region
    $region22: #{mnist_mlp_forward.1} parent=1 // pred_check
      _
    $region23: #{mnist_mlp_forward.1} parent=1 // pred_check_branch
      %46 = sbr.rel (0) target = $region25
    $region24: #{mnist_mlp_forward.1} parent=1 // pred_region
      _
    $region25: #{mnist_mlp_forward.1} parent=1 // pred_fallthru
      _
    // Predicated region
    $region26: #{mnist_mlp_forward.1} parent=1 // pred_check
      _
    $region27: #{mnist_mlp_forward.1} parent=1 // pred_check_branch
      %48 = sbr.rel (0) target = $region29
    $region28: #{mnist_mlp_forward.1} parent=1 // pred_region
      _
    $region29: #{mnist_mlp_forward.1} parent=1 // pred_fallthru
      _
    // Predicated region
    $region30: #{mnist_mlp_forward.1} parent=1 // pred_check
      _
    $region31: #{mnist_mlp_forward.1} parent=1 // pred_check_branch
      %50 = sbr.rel (0) target = $region33
    $region32: #{mnist_mlp_forward.1} parent=1 // pred_region
      %51 = dma.done [#allocation4], 25088
    $region33: #{mnist_mlp_forward.1} parent=1 // pred_fallthru
      _
    // Predicated region
    $region34: #{mnist_mlp_forward.1} parent=1 // pred_check
      _
    $region35: #{mnist_mlp_forward.1} parent=1 // pred_check_branch
      %53 = sbr.rel (0) target = $region37
    $region36: #{mnist_mlp_forward.1} parent=1 // pred_region
      %54 = dma.done [#allocation7], 16384
    $region37: #{mnist_mlp_forward.1} parent=1 // pred_fallthru
      _
    %v56 = vld [vmem:[%s0] sm:$0xff]
    %v57 = vld [vmem:[%s0 + $0x8] sm:$0xff]
    %v58 = vld [vmem:[%s0 + $0x10] sm:$0xff]
    %v59 = vld [vmem:[%s0 + $0x18] sm:$0xff]
    %v60 = vld [vmem:[%s0 + $0x20] sm:$0xff]
    %v61 = vld [vmem:[%s0 + $0x28] sm:$0xff]
    %v62 = vld [vmem:[%s0 + $0x30] sm:$0xff]
    %v63 = vpack.c.bf16 %v56, %v56
    %v64 = vpack.c.bf16 %v57, %v57
    %v65 = vpack.c.bf16 %v58, %v58
    %v66 = vpack.c.bf16 %v59, %v59
    %v67 = vpack.c.bf16 %v60, %v60
    %v68 = vpack.c.bf16 %v61, %v61
    %v69 = vpack.c.bf16 %v62, %v62
    %v70 = vld [vmem:[#allocation3] sm:$0xff]
    %v71 = vld [vmem:[#allocation3 + $0x8] sm:$0xff]
    %v72 = vld [vmem:[#allocation3 + $0x10] sm:$0xff]
    %v73 = vld [vmem:[#allocation3 + $0x18] sm:$0xff]
    %v74 = vld [vmem:[#allocation3 + $0x20] sm:$0xff]
    %v75 = vld [vmem:[#allocation3 + $0x28] sm:$0xff]
    %v76 = vld [vmem:[#allocation3 + $0x30] sm:$0xff]
    %v77 = vld [vmem:[#allocation3 + $0x38] sm:$0xff]
    %v78 = vld [vmem:[#allocation3 + $0x40] sm:$0xff]
    %v79 = vld [vmem:[#allocation3 + $0x48] sm:$0xff]
    %v80 = vld [vmem:[#allocation3 + $0x50] sm:$0xff]
    %v81 = vld [vmem:[#allocation3 + $0x58] sm:$0xff]
    %v82 = vld [vmem:[#allocation3 + $0x60] sm:$0xff]
    %v83 = vld [vmem:[#allocation3 + $0x68] sm:$0xff]
    %v84 = vld [vmem:[#allocation3 + $0x70] sm:$0xff]
    %v85 = vld [vmem:[#allocation3 + $0x78] sm:$0xff]
    %v86 = vld [vmem:[#allocation3 + $0x80] sm:$0xff]
    %v87 = vld [vmem:[#allocation3 + $0x88] sm:$0xff]
    %v88 = vld [vmem:[#allocation3 + $0x90] sm:$0xff]
    %v89 = vld [vmem:[#allocation3 + $0x98] sm:$0xff]
    %v90 = vld [vmem:[#allocation3 + $0xa0] sm:$0xff]
    %v91 = vld [vmem:[#allocation3 + $0xa8] sm:$0xff]
    %v92 = vld [vmem:[#allocation3 + $0xb0] sm:$0xff]
    %v93 = vld [vmem:[#allocation3 + $0xb8] sm:$0xff]
    %v94 = vld [vmem:[#allocation3 + $0xc0] sm:$0xff]
    %v95 = vld [vmem:[#allocation3 + $0xc8] sm:$0xff]
    %v96 = vld [vmem:[#allocation3 + $0xd0] sm:$0xff]
    %v97 = vld [vmem:[#allocation3 + $0xd8] sm:$0xff]
    %v98 = vld [vmem:[#allocation3 + $0xe0] sm:$0xff]
    %v99 = vld [vmem:[#allocation3 + $0xe8] sm:$0xff]
    %v100 = vld [vmem:[#allocation3 + $0xf0] sm:$0xff]
    %v101 = vld [vmem:[#allocation3 + $0xf8] sm:$0xff]
    %v102 = vld [vmem:[#allocation3 + $0x100] sm:$0xff]
    %v103 = vld [vmem:[#allocation3 + $0x108] sm:$0xff]
    %v104 = vld [vmem:[#allocation3 + $0x110] sm:$0xff]
    %v105 = vld [vmem:[#allocation3 + $0x118] sm:$0xff]
    %v106 = vld [vmem:[#allocation3 + $0x120] sm:$0xff]
    %v107 = vld [vmem:[#allocation3 + $0x128] sm:$0xff]
    %v108 = vld [vmem:[#allocation3 + $0x130] sm:$0xff]
    %v109 = vld [vmem:[#allocation3 + $0x138] sm:$0xff]
    %v110 = vld [vmem:[#allocation3 + $0x140] sm:$0xff]
    %v111 = vld [vmem:[#allocation3 + $0x148] sm:$0xff]
    %v112 = vld [vmem:[#allocation3 + $0x150] sm:$0xff]
    %v113 = vld [vmem:[#allocation3 + $0x158] sm:$0xff]
    %v114 = vld [vmem:[#allocation3 + $0x160] sm:$0xff]
    %v115 = vld [vmem:[#allocation3 + $0x168] sm:$0xff]
    %v116 = vld [vmem:[#allocation3 + $0x170] sm:$0xff]
    %v117 = vld [vmem:[#allocation3 + $0x178] sm:$0xff]
    %v118 = vld [vmem:[#allocation3 + $0x180] sm:$0xff]
    %v119 = vld [vmem:[#allocation3 + $0x188] sm:$0xff]
    %v120 = vld [vmem:[#allocation3 + $0x190] sm:$0xff]
    %v121 = vld [vmem:[#allocation3 + $0x198] sm:$0xff]
    %v122 = vld [vmem:[#allocation3 + $0x1a0] sm:$0xff]
    %v123 = vld [vmem:[#allocation3 + $0x1a8] sm:$0xff]
    %v124 = vld [vmem:[#allocation3 + $0x1b0] sm:$0xff]
    %v125 = vld [vmem:[#allocation3 + $0x1b8] sm:$0xff]
    %v126 = vld [vmem:[#allocation3 + $0x1c0] sm:$0xff]
    %v127 = vld [vmem:[#allocation3 + $0x1c8] sm:$0xff]
    %v128 = vld [vmem:[#allocation3 + $0x1d0] sm:$0xff]
    %v129 = vld [vmem:[#allocation3 + $0x1d8] sm:$0xff]
    %v130 = vld [vmem:[#allocation3 + $0x1e0] sm:$0xff]
    %v131 = vld [vmem:[#allocation3 + $0x1e8] sm:$0xff]
    %v132 = vld [vmem:[#allocation3 + $0x1f0] sm:$0xff]
    %v133 = vld [vmem:[#allocation3 + $0x1f8] sm:$0xff]
    %v134 = vld [vmem:[#allocation3 + $0x200] sm:$0xff]
    %v135 = vld [vmem:[#allocation3 + $0x208] sm:$0xff]
    %v136 = vld [vmem:[#allocation3 + $0x210] sm:$0xff]
    %v137 = vld [vmem:[#allocation3 + $0x218] sm:$0xff]
    %v138 = vld [vmem:[#allocation3 + $0x220] sm:$0xff]
    %v139 = vld [vmem:[#allocation3 + $0x228] sm:$0xff]
    %v140 = vld [vmem:[#allocation3 + $0x230] sm:$0xff]
    %v141 = vld [vmem:[#allocation3 + $0x238] sm:$0xff]
    %v142 = vld [vmem:[#allocation3 + $0x240] sm:$0xff]
    %v143 = vld [vmem:[#allocation3 + $0x248] sm:$0xff]
    %v144 = vld [vmem:[#allocation3 + $0x250] sm:$0xff]
    %v145 = vld [vmem:[#allocation3 + $0x258] sm:$0xff]
    %v146 = vld [vmem:[#allocation3 + $0x260] sm:$0xff]
    %v147 = vld [vmem:[#allocation3 + $0x268] sm:$0xff]
    %v148 = vld [vmem:[#allocation3 + $0x270] sm:$0xff]
    %v149 = vld [vmem:[#allocation3 + $0x278] sm:$0xff]
    %v150 = vld [vmem:[#allocation3 + $0x280] sm:$0xff]
    %v151 = vld [vmem:[#allocation3 + $0x288] sm:$0xff]
    %v152 = vld [vmem:[#allocation3 + $0x290] sm:$0xff]
    %v153 = vld [vmem:[#allocation3 + $0x298] sm:$0xff]
    %v154 = vld [vmem:[#allocation3 + $0x2a0] sm:$0xff]
    %v155 = vld [vmem:[#allocation3 + $0x2a8] sm:$0xff]
    %v156 = vld [vmem:[#allocation3 + $0x2b0] sm:$0xff]
    %v157 = vld [vmem:[#allocation3 + $0x2b8] sm:$0xff]
    %v158 = vld [vmem:[#allocation3 + $0x2c0] sm:$0xff]
    %v159 = vld [vmem:[#allocation3 + $0x2c8] sm:$0xff]
    %v160 = vld [vmem:[#allocation3 + $0x2d0] sm:$0xff]
    %v161 = vld [vmem:[#allocation3 + $0x2d8] sm:$0xff]
    %v162 = vld [vmem:[#allocation3 + $0x2e0] sm:$0xff]
    %v163 = vld [vmem:[#allocation3 + $0x2e8] sm:$0xff]
    %v164 = vld [vmem:[#allocation3 + $0x2f0] sm:$0xff]
    %v165 = vld [vmem:[#allocation3 + $0x2f8] sm:$0xff]
    %v166 = vld [vmem:[#allocation3 + $0x300] sm:$0xff]
    %v167 = vld [vmem:[#allocation3 + $0x308] sm:$0xff]
    %v168 = vld [vmem:[#allocation3 + $0x310] sm:$0xff]
    %v169 = vld [vmem:[#allocation3 + $0x318] sm:$0xff]
    %v170 = vld [vmem:[#allocation3 + $0x320] sm:$0xff]
    %v171 = vld [vmem:[#allocation3 + $0x328] sm:$0xff]
    %v172 = vld [vmem:[#allocation3 + $0x330] sm:$0xff]
    %v173 = vld [vmem:[#allocation3 + $0x338] sm:$0xff]
    %v174 = vld [vmem:[#allocation3 + $0x340] sm:$0xff]
    %v175 = vld [vmem:[#allocation3 + $0x348] sm:$0xff]
    %v176 = vld [vmem:[#allocation3 + $0x350] sm:$0xff]
    %v177 = vld [vmem:[#allocation3 + $0x358] sm:$0xff]
    %v178 = vld [vmem:[#allocation3 + $0x360] sm:$0xff]
    %v179 = vld [vmem:[#allocation3 + $0x368] sm:$0xff]
    %v180 = vld [vmem:[#allocation3 + $0x370] sm:$0xff]
    %v181 = vld [vmem:[#allocation3 + $0x378] sm:$0xff]
    %v182 = vld [vmem:[#allocation3 + $0x380] sm:$0xff]
    %v183 = vld [vmem:[#allocation3 + $0x388] sm:$0xff]
    %v184 = vld [vmem:[#allocation3 + $0x390] sm:$0xff]
    %v185 = vld [vmem:[#allocation3 + $0x398] sm:$0xff]
    %v186 = vld [vmem:[#allocation3 + $0x3a0] sm:$0xff]
    %v187 = vld [vmem:[#allocation3 + $0x3a8] sm:$0xff]
    %v188 = vld [vmem:[#allocation3 + $0x3b0] sm:$0xff]
    %v189 = vld [vmem:[#allocation3 + $0x3b8] sm:$0xff]
    %v190 = vld [vmem:[#allocation3 + $0x3c0] sm:$0xff]
    %v191 = vld [vmem:[#allocation3 + $0x3c8] sm:$0xff]
    %v192 = vld [vmem:[#allocation3 + $0x3d0] sm:$0xff]
    %v193 = vld [vmem:[#allocation3 + $0x3d8] sm:$0xff]
    %v194 = vld [vmem:[#allocation3 + $0x3e0] sm:$0xff]
    %v195 = vld [vmem:[#allocation3 + $0x3e8] sm:$0xff]
    %v196 = vld [vmem:[#allocation3 + $0x3f0] sm:$0xff]
    %v197 = vld [vmem:[#allocation3 + $0x3f8] sm:$0xff]
    %v198 = vld [vmem:[#allocation3 + $0x400] sm:$0xff]
    %v199 = vld [vmem:[#allocation3 + $0x408] sm:$0xff]
    %v200 = vld [vmem:[#allocation3 + $0x410] sm:$0xff]
    %v201 = vld [vmem:[#allocation3 + $0x418] sm:$0xff]
    %v202 = vld [vmem:[#allocation3 + $0x420] sm:$0xff]
    %v203 = vld [vmem:[#allocation3 + $0x428] sm:$0xff]
    %v204 = vld [vmem:[#allocation3 + $0x430] sm:$0xff]
    %v205 = vld [vmem:[#allocation3 + $0x438] sm:$0xff]
    %v206 = vld [vmem:[#allocation3 + $0x440] sm:$0xff]
    %v207 = vld [vmem:[#allocation3 + $0x448] sm:$0xff]
    %v208 = vld [vmem:[#allocation3 + $0x450] sm:$0xff]
    %v209 = vld [vmem:[#allocation3 + $0x458] sm:$0xff]
    %v210 = vld [vmem:[#allocation3 + $0x460] sm:$0xff]
    %v211 = vld [vmem:[#allocation3 + $0x468] sm:$0xff]
    %v212 = vld [vmem:[#allocation3 + $0x470] sm:$0xff]
    %v213 = vld [vmem:[#allocation3 + $0x478] sm:$0xff]
    %v214 = vld [vmem:[#allocation3 + $0x480] sm:$0xff]
    %v215 = vld [vmem:[#allocation3 + $0x488] sm:$0xff]
    %v216 = vld [vmem:[#allocation3 + $0x490] sm:$0xff]
    %v217 = vld [vmem:[#allocation3 + $0x498] sm:$0xff]
    %v218 = vld [vmem:[#allocation3 + $0x4a0] sm:$0xff]
    %v219 = vld [vmem:[#allocation3 + $0x4a8] sm:$0xff]
    %v220 = vld [vmem:[#allocation3 + $0x4b0] sm:$0xff]
    %v221 = vld [vmem:[#allocation3 + $0x4b8] sm:$0xff]
    %v222 = vld [vmem:[#allocation3 + $0x4c0] sm:$0xff]
    %v223 = vld [vmem:[#allocation3 + $0x4c8] sm:$0xff]
    %v224 = vld [vmem:[#allocation3 + $0x4d0] sm:$0xff]
    %v225 = vld [vmem:[#allocation3 + $0x4d8] sm:$0xff]
    %v226 = vld [vmem:[#allocation3 + $0x4e0] sm:$0xff]
    %v227 = vld [vmem:[#allocation3 + $0x4e8] sm:$0xff]
    %v228 = vld [vmem:[#allocation3 + $0x4f0] sm:$0xff]
    %v229 = vld [vmem:[#allocation3 + $0x4f8] sm:$0xff]
    %v230 = vld [vmem:[#allocation3 + $0x500] sm:$0xff]
    %v231 = vld [vmem:[#allocation3 + $0x508] sm:$0xff]
    %v232 = vld [vmem:[#allocation3 + $0x510] sm:$0xff]
    %v233 = vld [vmem:[#allocation3 + $0x518] sm:$0xff]
    %v234 = vld [vmem:[#allocation3 + $0x520] sm:$0xff]
    %v235 = vld [vmem:[#allocation3 + $0x528] sm:$0xff]
    %v236 = vld [vmem:[#allocation3 + $0x530] sm:$0xff]
    %v237 = vld [vmem:[#allocation3 + $0x538] sm:$0xff]
    %v238 = vld [vmem:[#allocation3 + $0x540] sm:$0xff]
    %v239 = vld [vmem:[#allocation3 + $0x548] sm:$0xff]
    %v240 = vld [vmem:[#allocation3 + $0x550] sm:$0xff]
    %v241 = vld [vmem:[#allocation3 + $0x558] sm:$0xff]
    %v242 = vld [vmem:[#allocation3 + $0x560] sm:$0xff]
    %v243 = vld [vmem:[#allocation3 + $0x568] sm:$0xff]
    %v244 = vld [vmem:[#allocation3 + $0x570] sm:$0xff]
    %v245 = vld [vmem:[#allocation3 + $0x578] sm:$0xff]
    %v246 = vld [vmem:[#allocation3 + $0x580] sm:$0xff]
    %v247 = vld [vmem:[#allocation3 + $0x588] sm:$0xff]
    %v248 = vld [vmem:[#allocation3 + $0x590] sm:$0xff]
    %v249 = vld [vmem:[#allocation3 + $0x598] sm:$0xff]
    %v250 = vld [vmem:[#allocation3 + $0x5a0] sm:$0xff]
    %v251 = vld [vmem:[#allocation3 + $0x5a8] sm:$0xff]
    %v252 = vld [vmem:[#allocation3 + $0x5b0] sm:$0xff]
    %v253 = vld [vmem:[#allocation3 + $0x5b8] sm:$0xff]
    %v254 = vld [vmem:[#allocation3 + $0x5c0] sm:$0xff]
    %v255 = vld [vmem:[#allocation3 + $0x5c8] sm:$0xff]
    %v256 = vld [vmem:[#allocation3 + $0x5d0] sm:$0xff]
    %v257 = vld [vmem:[#allocation3 + $0x5d8] sm:$0xff]
    %v258 = vld [vmem:[#allocation3 + $0x5e0] sm:$0xff]
    %v259 = vld [vmem:[#allocation3 + $0x5e8] sm:$0xff]
    %v260 = vld [vmem:[#allocation3 + $0x5f0] sm:$0xff]
    %v261 = vld [vmem:[#allocation3 + $0x5f8] sm:$0xff]
    %v262 = vld [vmem:[#allocation3 + $0x600] sm:$0xff]
    %v263 = vld [vmem:[#allocation3 + $0x608] sm:$0xff]
    %v264 = vld [vmem:[#allocation3 + $0x610] sm:$0xff]
    %v265 = vld [vmem:[#allocation3 + $0x618] sm:$0xff]
    %v266 = vld [vmem:[%s2] sm:$0xf]
    %v268 = vlaneseq
    %v269 = vshrl.u32 %v268, 7
    %v270 = vsub.s32 0, %v269
    %v271 = vrot.slane %v266, %v270
    %v272 = vlaneseq
    %v273 = vshrl.u32 %v272, 7
    %v274 = vsub.s32 1, %v273
    %v275 = vrot.slane %v266, %v274
    %v276 = vlaneseq
    %v277 = vshrl.u32 %v276, 7
    %v278 = vsub.s32 2, %v277
    %v279 = vrot.slane %v266, %v278
    %v280 = vlaneseq
    %v281 = vshrl.u32 %v280, 7
    %v282 = vsub.s32 3, %v281
    %v283 = vrot.slane %v266, %v282
    %v484 = vunpack.c.l.b16 %v70
    %v485 = vunpack.c.h.b16 %v70
    %v486 = vunpack.c.l.b16 %v71
    %v487 = vunpack.c.h.b16 %v71
    %v488 = vunpack.c.l.b16 %v72
    %v489 = vunpack.c.h.b16 %v72
    %v490 = vunpack.c.l.b16 %v73
    %v491 = vunpack.c.h.b16 %v73
    %v492 = vunpack.c.l.b16 %v74
    %v493 = vunpack.c.h.b16 %v74
    %v494 = vunpack.c.l.b16 %v75
    %v495 = vunpack.c.h.b16 %v75
    %v496 = vunpack.c.l.b16 %v76
    %v497 = vunpack.c.h.b16 %v76
    %v498 = vunpack.c.l.b16 %v77
    %v499 = vunpack.c.h.b16 %v77
    %v500 = vunpack.c.l.b16 %v78
    %v501 = vunpack.c.h.b16 %v78
    %v502 = vunpack.c.l.b16 %v79
    %v503 = vunpack.c.h.b16 %v79
    %v504 = vunpack.c.l.b16 %v80
    %v505 = vunpack.c.h.b16 %v80
    %v506 = vunpack.c.l.b16 %v81
    %v507 = vunpack.c.h.b16 %v81
    %v508 = vunpack.c.l.b16 %v82
    %v509 = vunpack.c.h.b16 %v82
    %v510 = vunpack.c.l.b16 %v83
    %v511 = vunpack.c.h.b16 %v83
    %v512 = vunpack.c.l.b16 %v84
    %v513 = vunpack.c.h.b16 %v84
    %v514 = vunpack.c.l.b16 %v85
    %v515 = vunpack.c.h.b16 %v85
    %v516 = vunpack.c.l.b16 %v86
    %v517 = vunpack.c.h.b16 %v86
    %v518 = vunpack.c.l.b16 %v87
    %v519 = vunpack.c.h.b16 %v87
    %v520 = vunpack.c.l.b16 %v88
    %v521 = vunpack.c.h.b16 %v88
    %v522 = vunpack.c.l.b16 %v89
    %v523 = vunpack.c.h.b16 %v89
    %v524 = vunpack.c.l.b16 %v90
    %v525 = vunpack.c.h.b16 %v90
    %v526 = vunpack.c.l.b16 %v91
    %v527 = vunpack.c.h.b16 %v91
    %v528 = vunpack.c.l.b16 %v92
    %v529 = vunpack.c.h.b16 %v92
    %v530 = vunpack.c.l.b16 %v93
    %v531 = vunpack.c.h.b16 %v93
    %v532 = vunpack.c.l.b16 %v94
    %v533 = vunpack.c.h.b16 %v94
    %v534 = vunpack.c.l.b16 %v95
    %v535 = vunpack.c.h.b16 %v95
    %v536 = vunpack.c.l.b16 %v96
    %v537 = vunpack.c.h.b16 %v96
    %v538 = vunpack.c.l.b16 %v97
    %v539 = vunpack.c.h.b16 %v97
    %v540 = vunpack.c.l.b16 %v98
    %v541 = vunpack.c.h.b16 %v98
    %v542 = vunpack.c.l.b16 %v99
    %v543 = vunpack.c.h.b16 %v99
    %v544 = vunpack.c.l.b16 %v100
    %v545 = vunpack.c.h.b16 %v100
    %v546 = vunpack.c.l.b16 %v101
    %v547 = vunpack.c.h.b16 %v101
    %v548 = vunpack.c.l.b16 %v102
    %v549 = vunpack.c.h.b16 %v102
    %v550 = vunpack.c.l.b16 %v103
    %v551 = vunpack.c.h.b16 %v103
    %v552 = vunpack.c.l.b16 %v104
    %v553 = vunpack.c.h.b16 %v104
    %v554 = vunpack.c.l.b16 %v105
    %v555 = vunpack.c.h.b16 %v105
    %v556 = vunpack.c.l.b16 %v106
    %v557 = vunpack.c.h.b16 %v106
    %v558 = vunpack.c.l.b16 %v107
    %v559 = vunpack.c.h.b16 %v107
    %v560 = vunpack.c.l.b16 %v108
    %v561 = vunpack.c.h.b16 %v108
    %v562 = vunpack.c.l.b16 %v109
    %v563 = vunpack.c.h.b16 %v109
    %v564 = vunpack.c.l.b16 %v110
    %v565 = vunpack.c.h.b16 %v110
    %v566 = vunpack.c.l.b16 %v111
    %v567 = vunpack.c.h.b16 %v111
    %v568 = vunpack.c.l.b16 %v112
    %v569 = vunpack.c.h.b16 %v112
    %v570 = vunpack.c.l.b16 %v113
    %v571 = vunpack.c.h.b16 %v113
    %v572 = vunpack.c.l.b16 %v114
    %v573 = vunpack.c.h.b16 %v114
    %v574 = vunpack.c.l.b16 %v115
    %v575 = vunpack.c.h.b16 %v115
    %v576 = vunpack.c.l.b16 %v116
    %v577 = vunpack.c.h.b16 %v116
    %v578 = vunpack.c.l.b16 %v117
    %v579 = vunpack.c.h.b16 %v117
    %v580 = vunpack.c.l.b16 %v118
    %v581 = vunpack.c.h.b16 %v118
    %v582 = vunpack.c.l.b16 %v119
    %v583 = vunpack.c.h.b16 %v119
    %v584 = vunpack.c.l.b16 %v120
    %v585 = vunpack.c.h.b16 %v120
    %v586 = vunpack.c.l.b16 %v121
    %v587 = vunpack.c.h.b16 %v121
    %v588 = vunpack.c.l.b16 %v122
    %v589 = vunpack.c.h.b16 %v122
    %v590 = vunpack.c.l.b16 %v123
    %v591 = vunpack.c.h.b16 %v123
    %v592 = vunpack.c.l.b16 %v124
    %v593 = vunpack.c.h.b16 %v124
    %v594 = vunpack.c.l.b16 %v125
    %v595 = vunpack.c.h.b16 %v125
    %v596 = vunpack.c.l.b16 %v126
    %v597 = vunpack.c.h.b16 %v126
    %v598 = vunpack.c.l.b16 %v127
    %v599 = vunpack.c.h.b16 %v127
    %v600 = vunpack.c.l.b16 %v128
    %v601 = vunpack.c.h.b16 %v128
    %v602 = vunpack.c.l.b16 %v129
    %v603 = vunpack.c.h.b16 %v129
    %v604 = vunpack.c.l.b16 %v130
    %v605 = vunpack.c.h.b16 %v130
    %v606 = vunpack.c.l.b16 %v131
    %v607 = vunpack.c.h.b16 %v131
    %v608 = vunpack.c.l.b16 %v132
    %v609 = vunpack.c.h.b16 %v132
    %v610 = vunpack.c.l.b16 %v133
    %v611 = vunpack.c.h.b16 %v133
    %v612 = vunpack.c.l.b16 %v134
    %v613 = vunpack.c.h.b16 %v134
    %v614 = vunpack.c.l.b16 %v135
    %v615 = vunpack.c.h.b16 %v135
    %v616 = vunpack.c.l.b16 %v136
    %v617 = vunpack.c.h.b16 %v136
    %v618 = vunpack.c.l.b16 %v137
    %v619 = vunpack.c.h.b16 %v137
    %v620 = vunpack.c.l.b16 %v138
    %v621 = vunpack.c.h.b16 %v138
    %v622 = vunpack.c.l.b16 %v139
    %v623 = vunpack.c.h.b16 %v139
    %v624 = vunpack.c.l.b16 %v140
    %v625 = vunpack.c.h.b16 %v140
    %v626 = vunpack.c.l.b16 %v141
    %v627 = vunpack.c.h.b16 %v141
    %v628 = vunpack.c.l.b16 %v142
    %v629 = vunpack.c.h.b16 %v142
    %v630 = vunpack.c.l.b16 %v143
    %v631 = vunpack.c.h.b16 %v143
    %v632 = vunpack.c.l.b16 %v144
    %v633 = vunpack.c.h.b16 %v144
    %v634 = vunpack.c.l.b16 %v145
    %v635 = vunpack.c.h.b16 %v145
    %v636 = vunpack.c.l.b16 %v146
    %v637 = vunpack.c.h.b16 %v146
    %v638 = vunpack.c.l.b16 %v147
    %v639 = vunpack.c.h.b16 %v147
    %v640 = vunpack.c.l.b16 %v148
    %v641 = vunpack.c.h.b16 %v148
    %v642 = vunpack.c.l.b16 %v149
    %v643 = vunpack.c.h.b16 %v149
    %v644 = vunpack.c.l.b16 %v150
    %v645 = vunpack.c.h.b16 %v150
    %v646 = vunpack.c.l.b16 %v151
    %v647 = vunpack.c.h.b16 %v151
    %v648 = vunpack.c.l.b16 %v152
    %v649 = vunpack.c.h.b16 %v152
    %v650 = vunpack.c.l.b16 %v153
    %v651 = vunpack.c.h.b16 %v153
    %v652 = vunpack.c.l.b16 %v154
    %v653 = vunpack.c.h.b16 %v154
    %v654 = vunpack.c.l.b16 %v155
    %v655 = vunpack.c.h.b16 %v155
    %v656 = vunpack.c.l.b16 %v156
    %v657 = vunpack.c.h.b16 %v156
    %v658 = vunpack.c.l.b16 %v157
    %v659 = vunpack.c.h.b16 %v157
    %v660 = vunpack.c.l.b16 %v158
    %v661 = vunpack.c.h.b16 %v158
    %v662 = vunpack.c.l.b16 %v159
    %v663 = vunpack.c.h.b16 %v159
    %v664 = vunpack.c.l.b16 %v160
    %v665 = vunpack.c.h.b16 %v160
    %v666 = vunpack.c.l.b16 %v161
    %v667 = vunpack.c.h.b16 %v161
    %v668 = vunpack.c.l.b16 %v162
    %v669 = vunpack.c.h.b16 %v162
    %v670 = vunpack.c.l.b16 %v163
    %v671 = vunpack.c.h.b16 %v163
    %v672 = vunpack.c.l.b16 %v164
    %v673 = vunpack.c.h.b16 %v164
    %v674 = vunpack.c.l.b16 %v165
    %v675 = vunpack.c.h.b16 %v165
    %v676 = vunpack.c.l.b16 %v166
    %v677 = vunpack.c.h.b16 %v166
    %v678 = vunpack.c.l.b16 %v167
    %v679 = vunpack.c.h.b16 %v167
    %v680 = vunpack.c.l.b16 %v168
    %v681 = vunpack.c.h.b16 %v168
    %v682 = vunpack.c.l.b16 %v169
    %v683 = vunpack.c.h.b16 %v169
    %v684 = vunpack.c.l.b16 %v170
    %v685 = vunpack.c.h.b16 %v170
    %v686 = vunpack.c.l.b16 %v171
    %v687 = vunpack.c.h.b16 %v171
    %v688 = vunpack.c.l.b16 %v172
    %v689 = vunpack.c.h.b16 %v172
    %v690 = vunpack.c.l.b16 %v173
    %v691 = vunpack.c.h.b16 %v173
    %v692 = vunpack.c.l.b16 %v174
    %v693 = vunpack.c.h.b16 %v174
    %v694 = vunpack.c.l.b16 %v175
    %v695 = vunpack.c.h.b16 %v175
    %v696 = vunpack.c.l.b16 %v176
    %v697 = vunpack.c.h.b16 %v176
    %v698 = vunpack.c.l.b16 %v177
    %v699 = vunpack.c.h.b16 %v177
    %v700 = vunpack.c.l.b16 %v178
    %v701 = vunpack.c.h.b16 %v178
    %v702 = vunpack.c.l.b16 %v179
    %v703 = vunpack.c.h.b16 %v179
    %v704 = vunpack.c.l.b16 %v180
    %v705 = vunpack.c.h.b16 %v180
    %v706 = vunpack.c.l.b16 %v181
    %v707 = vunpack.c.h.b16 %v181
    %v708 = vunpack.c.l.b16 %v182
    %v709 = vunpack.c.h.b16 %v182
    %v710 = vunpack.c.l.b16 %v183
    %v711 = vunpack.c.h.b16 %v183
    %v712 = vunpack.c.l.b16 %v184
    %v713 = vunpack.c.h.b16 %v184
    %v714 = vunpack.c.l.b16 %v185
    %v715 = vunpack.c.h.b16 %v185
    %v716 = vunpack.c.l.b16 %v186
    %v717 = vunpack.c.h.b16 %v186
    %v718 = vunpack.c.l.b16 %v187
    %v719 = vunpack.c.h.b16 %v187
    %v720 = vunpack.c.l.b16 %v188
    %v721 = vunpack.c.h.b16 %v188
    %v722 = vunpack.c.l.b16 %v189
    %v723 = vunpack.c.h.b16 %v189
    %v724 = vunpack.c.l.b16 %v190
    %v725 = vunpack.c.h.b16 %v190
    %v726 = vunpack.c.l.b16 %v191
    %v727 = vunpack.c.h.b16 %v191
    %v728 = vunpack.c.l.b16 %v192
    %v729 = vunpack.c.h.b16 %v192
    %v730 = vunpack.c.l.b16 %v193
    %v731 = vunpack.c.h.b16 %v193
    %v732 = vunpack.c.l.b16 %v194
    %v733 = vunpack.c.h.b16 %v194
    %v734 = vunpack.c.l.b16 %v195
    %v735 = vunpack.c.h.b16 %v195
    %v736 = vunpack.c.l.b16 %v196
    %v737 = vunpack.c.h.b16 %v196
    %v738 = vunpack.c.l.b16 %v197
    %v739 = vunpack.c.h.b16 %v197
    %v740 = vunpack.c.l.b16 %v198
    %v741 = vunpack.c.h.b16 %v198
    %v742 = vunpack.c.l.b16 %v199
    %v743 = vunpack.c.h.b16 %v199
    %v744 = vunpack.c.l.b16 %v200
    %v745 = vunpack.c.h.b16 %v200
    %v746 = vunpack.c.l.b16 %v201
    %v747 = vunpack.c.h.b16 %v201
    %v748 = vunpack.c.l.b16 %v202
    %v749 = vunpack.c.h.b16 %v202
    %v750 = vunpack.c.l.b16 %v203
    %v751 = vunpack.c.h.b16 %v203
    %v752 = vunpack.c.l.b16 %v204
    %v753 = vunpack.c.h.b16 %v204
    %v754 = vunpack.c.l.b16 %v205
    %v755 = vunpack.c.h.b16 %v205
    %v756 = vunpack.c.l.b16 %v206
    %v757 = vunpack.c.h.b16 %v206
    %v758 = vunpack.c.l.b16 %v207
    %v759 = vunpack.c.h.b16 %v207
    %v760 = vunpack.c.l.b16 %v208
    %v761 = vunpack.c.h.b16 %v208
    %v762 = vunpack.c.l.b16 %v209
    %v763 = vunpack.c.h.b16 %v209
    %v764 = vunpack.c.l.b16 %v210
    %v765 = vunpack.c.h.b16 %v210
    %v766 = vunpack.c.l.b16 %v211
    %v767 = vunpack.c.h.b16 %v211
    %v768 = vunpack.c.l.b16 %v212
    %v769 = vunpack.c.h.b16 %v212
    %v770 = vunpack.c.l.b16 %v213
    %v771 = vunpack.c.h.b16 %v213
    %v772 = vunpack.c.l.b16 %v214
    %v773 = vunpack.c.h.b16 %v214
    %v774 = vunpack.c.l.b16 %v215
    %v775 = vunpack.c.h.b16 %v215
    %v776 = vunpack.c.l.b16 %v216
    %v777 = vunpack.c.h.b16 %v216
    %v778 = vunpack.c.l.b16 %v217
    %v779 = vunpack.c.h.b16 %v217
    %v780 = vunpack.c.l.b16 %v218
    %v781 = vunpack.c.h.b16 %v218
    %v782 = vunpack.c.l.b16 %v219
    %v783 = vunpack.c.h.b16 %v219
    %v784 = vunpack.c.l.b16 %v220
    %v785 = vunpack.c.h.b16 %v220
    %v786 = vunpack.c.l.b16 %v221
    %v787 = vunpack.c.h.b16 %v221
    %v788 = vunpack.c.l.b16 %v222
    %v789 = vunpack.c.h.b16 %v222
    %v790 = vunpack.c.l.b16 %v223
    %v791 = vunpack.c.h.b16 %v223
    %v792 = vunpack.c.l.b16 %v224
    %v793 = vunpack.c.h.b16 %v224
    %v794 = vunpack.c.l.b16 %v225
    %v795 = vunpack.c.h.b16 %v225
    %v796 = vunpack.c.l.b16 %v226
    %v797 = vunpack.c.h.b16 %v226
    %v798 = vunpack.c.l.b16 %v227
    %v799 = vunpack.c.h.b16 %v227
    %v800 = vunpack.c.l.b16 %v228
    %v801 = vunpack.c.h.b16 %v228
    %v802 = vunpack.c.l.b16 %v229
    %v803 = vunpack.c.h.b16 %v229
    %v804 = vunpack.c.l.b16 %v230
    %v805 = vunpack.c.h.b16 %v230
    %v806 = vunpack.c.l.b16 %v231
    %v807 = vunpack.c.h.b16 %v231
    %v808 = vunpack.c.l.b16 %v232
    %v809 = vunpack.c.h.b16 %v232
    %v810 = vunpack.c.l.b16 %v233
    %v811 = vunpack.c.h.b16 %v233
    %v812 = vunpack.c.l.b16 %v234
    %v813 = vunpack.c.h.b16 %v234
    %v814 = vunpack.c.l.b16 %v235
    %v815 = vunpack.c.h.b16 %v235
    %v816 = vunpack.c.l.b16 %v236
    %v817 = vunpack.c.h.b16 %v236
    %v818 = vunpack.c.l.b16 %v237
    %v819 = vunpack.c.h.b16 %v237
    %v820 = vunpack.c.l.b16 %v238
    %v821 = vunpack.c.h.b16 %v238
    %v822 = vunpack.c.l.b16 %v239
    %v823 = vunpack.c.h.b16 %v239
    %v824 = vunpack.c.l.b16 %v240
    %v825 = vunpack.c.h.b16 %v240
    %v826 = vunpack.c.l.b16 %v241
    %v827 = vunpack.c.h.b16 %v241
    %v828 = vunpack.c.l.b16 %v242
    %v829 = vunpack.c.h.b16 %v242
    %v830 = vunpack.c.l.b16 %v243
    %v831 = vunpack.c.h.b16 %v243
    %v832 = vunpack.c.l.b16 %v244
    %v833 = vunpack.c.h.b16 %v244
    %v834 = vunpack.c.l.b16 %v245
    %v835 = vunpack.c.h.b16 %v245
    %v836 = vunpack.c.l.b16 %v246
    %v837 = vunpack.c.h.b16 %v246
    %v838 = vunpack.c.l.b16 %v247
    %v839 = vunpack.c.h.b16 %v247
    %v840 = vunpack.c.l.b16 %v248
    %v841 = vunpack.c.h.b16 %v248
    %v842 = vunpack.c.l.b16 %v249
    %v843 = vunpack.c.h.b16 %v249
    %v844 = vunpack.c.l.b16 %v250
    %v845 = vunpack.c.h.b16 %v250
    %v846 = vunpack.c.l.b16 %v251
    %v847 = vunpack.c.h.b16 %v251
    %v848 = vunpack.c.l.b16 %v252
    %v849 = vunpack.c.h.b16 %v252
    %v850 = vunpack.c.l.b16 %v253
    %v851 = vunpack.c.h.b16 %v253
    %v852 = vunpack.c.l.b16 %v254
    %v853 = vunpack.c.h.b16 %v254
    %v854 = vunpack.c.l.b16 %v255
    %v855 = vunpack.c.h.b16 %v255
    %v856 = vunpack.c.l.b16 %v256
    %v857 = vunpack.c.h.b16 %v256
    %v858 = vunpack.c.l.b16 %v257
    %v859 = vunpack.c.h.b16 %v257
    %v860 = vunpack.c.l.b16 %v258
    %v861 = vunpack.c.h.b16 %v258
    %v862 = vunpack.c.l.b16 %v259
    %v863 = vunpack.c.h.b16 %v259
    %v864 = vunpack.c.l.b16 %v260
    %v865 = vunpack.c.h.b16 %v260
    %v866 = vunpack.c.l.b16 %v261
    %v867 = vunpack.c.h.b16 %v261
    %v868 = vunpack.c.l.b16 %v262
    %v869 = vunpack.c.h.b16 %v262
    %v870 = vunpack.c.l.b16 %v263
    %v871 = vunpack.c.h.b16 %v263
    %v872 = vunpack.c.l.b16 %v264
    %v873 = vunpack.c.h.b16 %v264
    %v874 = vunpack.c.l.b16 %v265
    %v875 = vunpack.c.h.b16 %v265
    %v876 = vpack.c.b16 %v488, %v484
    %v877 = vpack.c.b16 %v489, %v485
    %v878 = vpack.c.b16 %v490, %v486
    %v879 = vpack.c.b16 %v491, %v487
    %v880 = vpack.c.b16 %v496, %v492
    %v881 = vpack.c.b16 %v497, %v493
    %v882 = vpack.c.b16 %v498, %v494
    %v883 = vpack.c.b16 %v499, %v495
    %v884 = vpack.c.b16 %v504, %v500
    %v885 = vpack.c.b16 %v505, %v501
    %v886 = vpack.c.b16 %v506, %v502
    %v887 = vpack.c.b16 %v507, %v503
    %v888 = vpack.c.b16 %v512, %v508
    %v889 = vpack.c.b16 %v513, %v509
    %v890 = vpack.c.b16 %v514, %v510
    %v891 = vpack.c.b16 %v515, %v511
    %v892 = vpack.c.b16 %v520, %v516
    %v893 = vpack.c.b16 %v521, %v517
    %v894 = vpack.c.b16 %v522, %v518
    %v895 = vpack.c.b16 %v523, %v519
    %v896 = vpack.c.b16 %v528, %v524
    %v897 = vpack.c.b16 %v529, %v525
    %v898 = vpack.c.b16 %v530, %v526
    %v899 = vpack.c.b16 %v531, %v527
    %v900 = vpack.c.b16 %v536, %v532
    %v901 = vpack.c.b16 %v537, %v533
    %v902 = vpack.c.b16 %v538, %v534
    %v903 = vpack.c.b16 %v539, %v535
    %v904 = vpack.c.b16 %v544, %v540
    %v905 = vpack.c.b16 %v545, %v541
    %v906 = vpack.c.b16 %v546, %v542
    %v907 = vpack.c.b16 %v547, %v543
    %v908 = vpack.c.b16 %v552, %v548
    %v909 = vpack.c.b16 %v553, %v549
    %v910 = vpack.c.b16 %v554, %v550
    %v911 = vpack.c.b16 %v555, %v551
    %v912 = vpack.c.b16 %v560, %v556
    %v913 = vpack.c.b16 %v561, %v557
    %v914 = vpack.c.b16 %v562, %v558
    %v915 = vpack.c.b16 %v563, %v559
    %v916 = vpack.c.b16 %v568, %v564
    %v917 = vpack.c.b16 %v569, %v565
    %v918 = vpack.c.b16 %v570, %v566
    %v919 = vpack.c.b16 %v571, %v567
    %v920 = vpack.c.b16 %v576, %v572
    %v921 = vpack.c.b16 %v577, %v573
    %v922 = vpack.c.b16 %v578, %v574
    %v923 = vpack.c.b16 %v579, %v575
    %v924 = vpack.c.b16 %v584, %v580
    %v925 = vpack.c.b16 %v585, %v581
    %v926 = vpack.c.b16 %v586, %v582
    %v927 = vpack.c.b16 %v587, %v583
    %v928 = vpack.c.b16 %v592, %v588
    %v929 = vpack.c.b16 %v593, %v589
    %v930 = vpack.c.b16 %v594, %v590
    %v931 = vpack.c.b16 %v595, %v591
    %v932 = vpack.c.b16 %v600, %v596
    %v933 = vpack.c.b16 %v601, %v597
    %v934 = vpack.c.b16 %v602, %v598
    %v935 = vpack.c.b16 %v603, %v599
    %v936 = vpack.c.b16 %v608, %v604
    %v937 = vpack.c.b16 %v609, %v605
    %v938 = vpack.c.b16 %v610, %v606
    %v939 = vpack.c.b16 %v611, %v607
    %v940 = vpack.c.b16 %v616, %v612
    %v941 = vpack.c.b16 %v617, %v613
    %v942 = vpack.c.b16 %v618, %v614
    %v943 = vpack.c.b16 %v619, %v615
    %v944 = vpack.c.b16 %v624, %v620
    %v945 = vpack.c.b16 %v625, %v621
    %v946 = vpack.c.b16 %v626, %v622
    %v947 = vpack.c.b16 %v627, %v623
    %v948 = vpack.c.b16 %v632, %v628
    %v949 = vpack.c.b16 %v633, %v629
    %v950 = vpack.c.b16 %v634, %v630
    %v951 = vpack.c.b16 %v635, %v631
    %v952 = vpack.c.b16 %v640, %v636
    %v953 = vpack.c.b16 %v641, %v637
    %v954 = vpack.c.b16 %v642, %v638
    %v955 = vpack.c.b16 %v643, %v639
    %v956 = vpack.c.b16 %v648, %v644
    %v957 = vpack.c.b16 %v649, %v645
    %v958 = vpack.c.b16 %v650, %v646
    %v959 = vpack.c.b16 %v651, %v647
    %v960 = vpack.c.b16 %v656, %v652
    %v961 = vpack.c.b16 %v657, %v653
    %v962 = vpack.c.b16 %v658, %v654
    %v963 = vpack.c.b16 %v659, %v655
    %v964 = vpack.c.b16 %v664, %v660
    %v965 = vpack.c.b16 %v665, %v661
    %v966 = vpack.c.b16 %v666, %v662
    %v967 = vpack.c.b16 %v667, %v663
    %v968 = vpack.c.b16 %v672, %v668
    %v969 = vpack.c.b16 %v673, %v669
    %v970 = vpack.c.b16 %v674, %v670
    %v971 = vpack.c.b16 %v675, %v671
    %v972 = vpack.c.b16 %v680, %v676
    %v973 = vpack.c.b16 %v681, %v677
    %v974 = vpack.c.b16 %v682, %v678
    %v975 = vpack.c.b16 %v683, %v679
    %v976 = vpack.c.b16 %v688, %v684
    %v977 = vpack.c.b16 %v689, %v685
    %v978 = vpack.c.b16 %v690, %v686
    %v979 = vpack.c.b16 %v691, %v687
    %v980 = vpack.c.b16 %v696, %v692
    %v981 = vpack.c.b16 %v697, %v693
    %v982 = vpack.c.b16 %v698, %v694
    %v983 = vpack.c.b16 %v699, %v695
    %v984 = vpack.c.b16 %v704, %v700
    %v985 = vpack.c.b16 %v705, %v701
    %v986 = vpack.c.b16 %v706, %v702
    %v987 = vpack.c.b16 %v707, %v703
    %v988 = vpack.c.b16 %v712, %v708
    %v989 = vpack.c.b16 %v713, %v709
    %v990 = vpack.c.b16 %v714, %v710
    %v991 = vpack.c.b16 %v715, %v711
    %v992 = vpack.c.b16 %v720, %v716
    %v993 = vpack.c.b16 %v721, %v717
    %v994 = vpack.c.b16 %v722, %v718
    %v995 = vpack.c.b16 %v723, %v719
    %v996 = vpack.c.b16 %v728, %v724
    %v997 = vpack.c.b16 %v729, %v725
    %v998 = vpack.c.b16 %v730, %v726
    %v999 = vpack.c.b16 %v731, %v727
    %v1000 = vpack.c.b16 %v736, %v732
    %v1001 = vpack.c.b16 %v737, %v733
    %v1002 = vpack.c.b16 %v738, %v734
    %v1003 = vpack.c.b16 %v739, %v735
    %v1004 = vpack.c.b16 %v744, %v740
    %v1005 = vpack.c.b16 %v745, %v741
    %v1006 = vpack.c.b16 %v746, %v742
    %v1007 = vpack.c.b16 %v747, %v743
    %v1008 = vpack.c.b16 %v752, %v748
    %v1009 = vpack.c.b16 %v753, %v749
    %v1010 = vpack.c.b16 %v754, %v750
    %v1011 = vpack.c.b16 %v755, %v751
    %v1012 = vpack.c.b16 %v760, %v756
    %v1013 = vpack.c.b16 %v761, %v757
    %v1014 = vpack.c.b16 %v762, %v758
    %v1015 = vpack.c.b16 %v763, %v759
    %v1016 = vpack.c.b16 %v768, %v764
    %v1017 = vpack.c.b16 %v769, %v765
    %v1018 = vpack.c.b16 %v770, %v766
    %v1019 = vpack.c.b16 %v771, %v767
    %v1020 = vpack.c.b16 %v776, %v772
    %v1021 = vpack.c.b16 %v777, %v773
    %v1022 = vpack.c.b16 %v778, %v774
    %v1023 = vpack.c.b16 %v779, %v775
    %v1024 = vpack.c.b16 %v784, %v780
    %v1025 = vpack.c.b16 %v785, %v781
    %v1026 = vpack.c.b16 %v786, %v782
    %v1027 = vpack.c.b16 %v787, %v783
    %v1028 = vpack.c.b16 %v792, %v788
    %v1029 = vpack.c.b16 %v793, %v789
    %v1030 = vpack.c.b16 %v794, %v790
    %v1031 = vpack.c.b16 %v795, %v791
    %v1032 = vpack.c.b16 %v800, %v796
    %v1033 = vpack.c.b16 %v801, %v797
    %v1034 = vpack.c.b16 %v802, %v798
    %v1035 = vpack.c.b16 %v803, %v799
    %v1036 = vpack.c.b16 %v808, %v804
    %v1037 = vpack.c.b16 %v809, %v805
    %v1038 = vpack.c.b16 %v810, %v806
    %v1039 = vpack.c.b16 %v811, %v807
    %v1040 = vpack.c.b16 %v816, %v812
    %v1041 = vpack.c.b16 %v817, %v813
    %v1042 = vpack.c.b16 %v818, %v814
    %v1043 = vpack.c.b16 %v819, %v815
    %v1044 = vpack.c.b16 %v824, %v820
    %v1045 = vpack.c.b16 %v825, %v821
    %v1046 = vpack.c.b16 %v826, %v822
    %v1047 = vpack.c.b16 %v827, %v823
    %v1048 = vpack.c.b16 %v832, %v828
    %v1049 = vpack.c.b16 %v833, %v829
    %v1050 = vpack.c.b16 %v834, %v830
    %v1051 = vpack.c.b16 %v835, %v831
    %v1052 = vpack.c.b16 %v840, %v836
    %v1053 = vpack.c.b16 %v841, %v837
    %v1054 = vpack.c.b16 %v842, %v838
    %v1055 = vpack.c.b16 %v843, %v839
    %v1056 = vpack.c.b16 %v848, %v844
    %v1057 = vpack.c.b16 %v849, %v845
    %v1058 = vpack.c.b16 %v850, %v846
    %v1059 = vpack.c.b16 %v851, %v847
    %v1060 = vpack.c.b16 %v856, %v852
    %v1061 = vpack.c.b16 %v857, %v853
    %v1062 = vpack.c.b16 %v858, %v854
    %v1063 = vpack.c.b16 %v859, %v855
    %v1064 = vpack.c.b16 %v864, %v860
    %v1065 = vpack.c.b16 %v865, %v861
    %v1066 = vpack.c.b16 %v866, %v862
    %v1067 = vpack.c.b16 %v867, %v863
    %v1068 = vpack.c.b16 %v872, %v868
    %v1069 = vpack.c.b16 %v873, %v869
    %v1070 = vpack.c.b16 %v874, %v870
    %v1071 = vpack.c.b16 %v875, %v871
    %vm1268 = vcmask 130048
    %v1270 = vsel %vm1268, %v69, 0
    %1272 = vmatprep.subr.bf16.mxu0 %v877
    %1273 = vmatpush1.bf16.msra.mxu0 %v876
    %1274 = vmatprep.subr.bf16.mxu0 %v881
    %1275 = vmatpush1.bf16.msra.mxu0 %v880
    %1276 = vmatprep.subr.bf16.mxu0 %v885
    %1277 = vmatpush1.bf16.msra.mxu0 %v884
    %1278 = vmatprep.subr.bf16.mxu0 %v889
    %1279 = vmatpush1.bf16.msra.mxu0 %v888
    %1280 = vmatprep.subr.bf16.mxu0 %v893
    %1281 = vmatpush1.bf16.msra.mxu0 %v892
    %1282 = vmatprep.subr.bf16.mxu0 %v897
    %1283 = vmatpush1.bf16.msra.mxu0 %v896
    %1284 = vmatprep.subr.bf16.mxu0 %v901
    %1285 = vmatpush1.bf16.msra.mxu0 %v900
    %1286 = vmatprep.subr.bf16.mxu0 %v905
    %1287 = vmatpush1.bf16.msra.mxu0 %v904
    %1288 = vmatprep.subr.bf16.mxu0 %v909
    %1289 = vmatpush1.bf16.msra.mxu0 %v908
    %1290 = vmatprep.subr.bf16.mxu0 %v913
    %1291 = vmatpush1.bf16.msra.mxu0 %v912
    %1292 = vmatprep.subr.bf16.mxu0 %v917
    %1293 = vmatpush1.bf16.msra.mxu0 %v916
    %1294 = vmatprep.subr.bf16.mxu0 %v921
    %1295 = vmatpush1.bf16.msra.mxu0 %v920
    %1296 = vmatprep.subr.bf16.mxu0 %v925
    %1297 = vmatpush1.bf16.msra.mxu0 %v924
    %1298 = vmatprep.subr.bf16.mxu0 %v929
    %1299 = vmatpush1.bf16.msra.mxu0 %v928
    %1300 = vmatprep.subr.bf16.mxu0 %v933
    %1301 = vmatpush1.bf16.msra.mxu0 %v932
    %1302 = vmatprep.subr.bf16.mxu0 %v937
    %1303 = vmatpush1.bf16.msra.mxu0 %v936
    %1304 = vmatprep.mubr.bf16.mxu0 %v64
    %1305 = vmatmul.mubr.bf16.gmra.mrb[0].mxu0 %v63
    %v1306 = vpop.f32.mrb[0].mxu0
    %v1307 = vadd.f32 %v271, %v1306
    %v1308 = vpop.f32.mrb[0].mxu0
    %v1309 = vadd.f32 %v275, %v1308
    %v1310 = vpop.f32.mrb[0].mxu0
    %v1311 = vpop.f32.mrb[0].mxu0
    %1312 = vdwg.mxu0
    %1313 = vmatprep.subr.bf16.mxu0 %v941
    %1314 = vmatpush1.bf16.msra.mxu0 %v940
    %1315 = vmatprep.subr.bf16.mxu0 %v945
    %1316 = vmatpush1.bf16.msra.mxu0 %v944
    %1317 = vmatprep.subr.bf16.mxu0 %v949
    %1318 = vmatpush1.bf16.msra.mxu0 %v948
    %1319 = vmatprep.subr.bf16.mxu0 %v953
    %1320 = vmatpush1.bf16.msra.mxu0 %v952
    %1321 = vmatprep.subr.bf16.mxu0 %v957
    %1322 = vmatpush1.bf16.msra.mxu0 %v956
    %1323 = vmatprep.subr.bf16.mxu0 %v961
    %1324 = vmatpush1.bf16.msra.mxu0 %v960
    %1325 = vmatprep.subr.bf16.mxu0 %v965
    %1326 = vmatpush1.bf16.msra.mxu0 %v964
    %1327 = vmatprep.subr.bf16.mxu0 %v969
    %1328 = vmatpush1.bf16.msra.mxu0 %v968
    %1329 = vmatprep.subr.bf16.mxu0 %v973
    %1330 = vmatpush1.bf16.msra.mxu0 %v972
    %1331 = vmatprep.subr.bf16.mxu0 %v977
    %1332 = vmatpush1.bf16.msra.mxu0 %v976
    %1333 = vmatprep.subr.bf16.mxu0 %v981
    %1334 = vmatpush1.bf16.msra.mxu0 %v980
    %1335 = vmatprep.subr.bf16.mxu0 %v985
    %1336 = vmatpush1.bf16.msra.mxu0 %v984
    %1337 = vmatprep.subr.bf16.mxu0 %v989
    %1338 = vmatpush1.bf16.msra.mxu0 %v988
    %1339 = vmatprep.subr.bf16.mxu0 %v993
    %1340 = vmatpush1.bf16.msra.mxu0 %v992
    %1341 = vmatprep.subr.bf16.mxu0 %v997
    %1342 = vmatpush1.bf16.msra.mxu0 %v996
    %1343 = vmatprep.subr.bf16.mxu0 %v1001
    %1344 = vmatpush1.bf16.msra.mxu0 %v1000
    %1345 = vmatprep.mubr.bf16.mxu0 %v66
    %1346 = vmatmul.mubr.bf16.gmra.mrb[0].mxu0 %v65
    %v1347 = vpop.f32.mrb[0].mxu0
    %v1348 = vadd.f32 %v1307, %v1347
    %v1349 = vpop.f32.mrb[0].mxu0
    %v1350 = vadd.f32 %v1309, %v1349
    %v1351 = vpop.f32.mrb[0].mxu0
    %v1352 = vpop.f32.mrb[0].mxu0
    %1353 = vdwg.mxu0
    %1354 = vmatprep.subr.bf16.mxu0 %v1005
    %1355 = vmatpush1.bf16.msra.mxu0 %v1004
    %1356 = vmatprep.subr.bf16.mxu0 %v1009
    %1357 = vmatpush1.bf16.msra.mxu0 %v1008
    %1358 = vmatprep.subr.bf16.mxu0 %v1013
    %1359 = vmatpush1.bf16.msra.mxu0 %v1012
    %1360 = vmatprep.subr.bf16.mxu0 %v1017
    %1361 = vmatpush1.bf16.msra.mxu0 %v1016
    %1362 = vmatprep.subr.bf16.mxu0 %v1021
    %1363 = vmatpush1.bf16.msra.mxu0 %v1020
    %1364 = vmatprep.subr.bf16.mxu0 %v1025
    %1365 = vmatpush1.bf16.msra.mxu0 %v1024
    %1366 = vmatprep.subr.bf16.mxu0 %v1029
    %1367 = vmatpush1.bf16.msra.mxu0 %v1028
    %1368 = vmatprep.subr.bf16.mxu0 %v1033
    %1369 = vmatpush1.bf16.msra.mxu0 %v1032
    %1370 = vmatprep.subr.bf16.mxu0 %v1037
    %1371 = vmatpush1.bf16.msra.mxu0 %v1036
    %1372 = vmatprep.subr.bf16.mxu0 %v1041
    %1373 = vmatpush1.bf16.msra.mxu0 %v1040
    %1374 = vmatprep.subr.bf16.mxu0 %v1045
    %1375 = vmatpush1.bf16.msra.mxu0 %v1044
    %1376 = vmatprep.subr.bf16.mxu0 %v1049
    %1377 = vmatpush1.bf16.msra.mxu0 %v1048
    %1378 = vmatprep.subr.bf16.mxu0 %v1053
    %1379 = vmatpush1.bf16.msra.mxu0 %v1052
    %1380 = vmatprep.subr.bf16.mxu0 %v1057
    %1381 = vmatpush1.bf16.msra.mxu0 %v1056
    %1382 = vmatprep.subr.bf16.mxu0 %v1061
    %1383 = vmatpush1.bf16.msra.mxu0 %v1060
    %1384 = vmatprep.subr.bf16.mxu0 %v1065
    %1385 = vmatpush1.bf16.msra.mxu0 %v1064
    %1386 = vmatprep.mubr.bf16.mxu0 %v68
    %1387 = vmatmul.mubr.bf16.gmra.mrb[0].mxu0 %v67
    %v1388 = vpop.f32.mrb[0].mxu0
    %v1389 = vadd.f32 %v1348, %v1388
    %v1390 = vpop.f32.mrb[0].mxu0
    %v1391 = vadd.f32 %v1350, %v1390
    %v1392 = vpop.f32.mrb[0].mxu0
    %v1393 = vpop.f32.mrb[0].mxu0
    %1394 = vdwg.mxu0
    %1395 = vmatprep.subr.bf16.mxu0 %v1069
    %1396 = vmatpush1.bf16.msra.mxu0 %v1068
    %1397 = vmatprep.subr.bf16.mxu0 0
    %1398 = vmatpush1.bf16.msra.mxu0 0
    %1399 = vmatprep.subr.bf16.mxu0 0
    %1400 = vmatpush1.bf16.msra.mxu0 0
    %1401 = vmatprep.subr.bf16.mxu0 0
    %1402 = vmatpush1.bf16.msra.mxu0 0
    %1403 = vmatprep.subr.bf16.mxu0 0
    %1404 = vmatpush1.bf16.msra.mxu0 0
    %1405 = vmatprep.subr.bf16.mxu0 0
    %1406 = vmatpush1.bf16.msra.mxu0 0
    %1407 = vmatprep.subr.bf16.mxu0 0
    %1408 = vmatpush1.bf16.msra.mxu0 0
    %1409 = vmatprep.subr.bf16.mxu0 0
    %1410 = vmatpush1.bf16.msra.mxu0 0
    %1411 = vmatprep.subr.bf16.mxu0 0
    %1412 = vmatpush1.bf16.msra.mxu0 0
    %1413 = vmatprep.subr.bf16.mxu0 0
    %1414 = vmatpush1.bf16.msra.mxu0 0
    %1415 = vmatprep.subr.bf16.mxu0 0
    %1416 = vmatpush1.bf16.msra.mxu0 0
    %1417 = vmatprep.subr.bf16.mxu0 0
    %1418 = vmatpush1.bf16.msra.mxu0 0
    %1419 = vmatprep.subr.bf16.mxu0 0
    %1420 = vmatpush1.bf16.msra.mxu0 0
    %1421 = vmatprep.subr.bf16.mxu0 0
    %1422 = vmatpush1.bf16.msra.mxu0 0
    %1423 = vmatprep.subr.bf16.mxu0 0
    %1424 = vmatpush1.bf16.msra.mxu0 0
    %1425 = vmatprep.subr.bf16.mxu0 0
    %1426 = vmatpush1.bf16.msra.mxu0 0
    %1427 = vmatprep.mubr.bf16.mxu0 0
    %1428 = vmatmul.mubr.bf16.gmra.mrb[0].mxu0 %v1270
    %v1429 = vpop.f32.mrb[0].mxu0
    %v1430 = vadd.f32 %v1389, %v1429
    %v1431 = vpop.f32.mrb[0].mxu0
    %v1432 = vadd.f32 %v1391, %v1431
    %v1433 = vpop.f32.mrb[0].mxu0
    %v1434 = vpop.f32.mrb[0].mxu0
    %1435 = vdwg.mxu0
    %1436 = vmatprep.subr.bf16.mxu0 %v879
    %1437 = vmatpush1.bf16.msra.mxu0 %v878
    %1438 = vmatprep.subr.bf16.mxu0 %v883
    %1439 = vmatpush1.bf16.msra.mxu0 %v882
    %1440 = vmatprep.subr.bf16.mxu0 %v887
    %1441 = vmatpush1.bf16.msra.mxu0 %v886
    %1442 = vmatprep.subr.bf16.mxu0 %v891
    %1443 = vmatpush1.bf16.msra.mxu0 %v890
    %1444 = vmatprep.subr.bf16.mxu0 %v895
    %1445 = vmatpush1.bf16.msra.mxu0 %v894
    %1446 = vmatprep.subr.bf16.mxu0 %v899
    %1447 = vmatpush1.bf16.msra.mxu0 %v898
    %1448 = vmatprep.subr.bf16.mxu0 %v903
    %1449 = vmatpush1.bf16.msra.mxu0 %v902
    %1450 = vmatprep.subr.bf16.mxu0 %v907
    %1451 = vmatpush1.bf16.msra.mxu0 %v906
    %1452 = vmatprep.subr.bf16.mxu0 %v911
    %1453 = vmatpush1.bf16.msra.mxu0 %v910
    %1454 = vmatprep.subr.bf16.mxu0 %v915
    %1455 = vmatpush1.bf16.msra.mxu0 %v914
    %1456 = vmatprep.subr.bf16.mxu0 %v919
    %1457 = vmatpush1.bf16.msra.mxu0 %v918
    %1458 = vmatprep.subr.bf16.mxu0 %v923
    %1459 = vmatpush1.bf16.msra.mxu0 %v922
    %1460 = vmatprep.subr.bf16.mxu0 %v927
    %1461 = vmatpush1.bf16.msra.mxu0 %v926
    %1462 = vmatprep.subr.bf16.mxu0 %v931
    %1463 = vmatpush1.bf16.msra.mxu0 %v930
    %1464 = vmatprep.subr.bf16.mxu0 %v935
    %1465 = vmatpush1.bf16.msra.mxu0 %v934
    %1466 = vmatprep.subr.bf16.mxu0 %v939
    %1467 = vmatpush1.bf16.msra.mxu0 %v938
    %1468 = vmatprep.mubr.bf16.mxu0 %v64
    %1469 = vmatmul.mubr.bf16.gmra.mrb[0].mxu0 %v63
    %v1470 = vpop.f32.mrb[0].mxu0
    %v1471 = vadd.f32 %v279, %v1470
    %v1472 = vpop.f32.mrb[0].mxu0
    %v1473 = vadd.f32 %v283, %v1472
    %v1474 = vpop.f32.mrb[0].mxu0
    %v1475 = vpop.f32.mrb[0].mxu0
    %1476 = vdwg.mxu0
    %1477 = vmatprep.subr.bf16.mxu0 %v943
    %1478 = vmatpush1.bf16.msra.mxu0 %v942
    %1479 = vmatprep.subr.bf16.mxu0 %v947
    %1480 = vmatpush1.bf16.msra.mxu0 %v946
    %1481 = vmatprep.subr.bf16.mxu0 %v951
    %1482 = vmatpush1.bf16.msra.mxu0 %v950
    %1483 = vmatprep.subr.bf16.mxu0 %v955
    %1484 = vmatpush1.bf16.msra.mxu0 %v954
    %1485 = vmatprep.subr.bf16.mxu0 %v959
    %1486 = vmatpush1.bf16.msra.mxu0 %v958
    %1487 = vmatprep.subr.bf16.mxu0 %v963
    %1488 = vmatpush1.bf16.msra.mxu0 %v962
    %1489 = vmatprep.subr.bf16.mxu0 %v967
    %1490 = vmatpush1.bf16.msra.mxu0 %v966
    %1491 = vmatprep.subr.bf16.mxu0 %v971
    %1492 = vmatpush1.bf16.msra.mxu0 %v970
    %1493 = vmatprep.subr.bf16.mxu0 %v975
    %1494 = vmatpush1.bf16.msra.mxu0 %v974
    %1495 = vmatprep.subr.bf16.mxu0 %v979
    %1496 = vmatpush1.bf16.msra.mxu0 %v978
    %1497 = vmatprep.subr.bf16.mxu0 %v983
    %1498 = vmatpush1.bf16.msra.mxu0 %v982
    %1499 = vmatprep.subr.bf16.mxu0 %v987
    %1500 = vmatpush1.bf16.msra.mxu0 %v986
    %1501 = vmatprep.subr.bf16.mxu0 %v991
    %1502 = vmatpush1.bf16.msra.mxu0 %v990
    %1503 = vmatprep.subr.bf16.mxu0 %v995
    %1504 = vmatpush1.bf16.msra.mxu0 %v994
    %1505 = vmatprep.subr.bf16.mxu0 %v999
    %1506 = vmatpush1.bf16.msra.mxu0 %v998
    %1507 = vmatprep.subr.bf16.mxu0 %v1003
    %1508 = vmatpush1.bf16.msra.mxu0 %v1002
    %1509 = vmatprep.mubr.bf16.mxu0 %v66
    %1510 = vmatmul.mubr.bf16.gmra.mrb[0].mxu0 %v65
    %v1511 = vpop.f32.mrb[0].mxu0
    %v1512 = vadd.f32 %v1471, %v1511
    %v1513 = vpop.f32.mrb[0].mxu0
    %v1514 = vadd.f32 %v1473, %v1513
    %v1515 = vpop.f32.mrb[0].mxu0
    %v1516 = vpop.f32.mrb[0].mxu0
    %1517 = vdwg.mxu0
    %1518 = vmatprep.subr.bf16.mxu0 %v1007
    %1519 = vmatpush1.bf16.msra.mxu0 %v1006
    %1520 = vmatprep.subr.bf16.mxu0 %v1011
    %1521 = vmatpush1.bf16.msra.mxu0 %v1010
    %1522 = vmatprep.subr.bf16.mxu0 %v1015
    %1523 = vmatpush1.bf16.msra.mxu0 %v1014
    %1524 = vmatprep.subr.bf16.mxu0 %v1019
    %1525 = vmatpush1.bf16.msra.mxu0 %v1018
    %1526 = vmatprep.subr.bf16.mxu0 %v1023
    %1527 = vmatpush1.bf16.msra.mxu0 %v1022
    %1528 = vmatprep.subr.bf16.mxu0 %v1027
    %1529 = vmatpush1.bf16.msra.mxu0 %v1026
    %1530 = vmatprep.subr.bf16.mxu0 %v1031
    %1531 = vmatpush1.bf16.msra.mxu0 %v1030
    %1532 = vmatprep.subr.bf16.mxu0 %v1035
    %1533 = vmatpush1.bf16.msra.mxu0 %v1034
    %1534 = vmatprep.subr.bf16.mxu0 %v1039
    %1535 = vmatpush1.bf16.msra.mxu0 %v1038
    %1536 = vmatprep.subr.bf16.mxu0 %v1043
    %1537 = vmatpush1.bf16.msra.mxu0 %v1042
    %1538 = vmatprep.subr.bf16.mxu0 %v1047
    %1539 = vmatpush1.bf16.msra.mxu0 %v1046
    %1540 = vmatprep.subr.bf16.mxu0 %v1051
    %1541 = vmatpush1.bf16.msra.mxu0 %v1050
    %1542 = vmatprep.subr.bf16.mxu0 %v1055
    %1543 = vmatpush1.bf16.msra.mxu0 %v1054
    %1544 = vmatprep.subr.bf16.mxu0 %v1059
    %1545 = vmatpush1.bf16.msra.mxu0 %v1058
    %1546 = vmatprep.subr.bf16.mxu0 %v1063
    %1547 = vmatpush1.bf16.msra.mxu0 %v1062
    %1548 = vmatprep.subr.bf16.mxu0 %v1067
    %1549 = vmatpush1.bf16.msra.mxu0 %v1066
    %1550 = vmatprep.mubr.bf16.mxu0 %v68
    %1551 = vmatmul.mubr.bf16.gmra.mrb[0].mxu0 %v67
    %v1552 = vpop.f32.mrb[0].mxu0
    %v1553 = vadd.f32 %v1512, %v1552
    %v1554 = vpop.f32.mrb[0].mxu0
    %v1555 = vadd.f32 %v1514, %v1554
    %v1556 = vpop.f32.mrb[0].mxu0
    %v1557 = vpop.f32.mrb[0].mxu0
    %1558 = vdwg.mxu0
    %1559 = vmatprep.subr.bf16.mxu0 %v1071
    %1560 = vmatpush1.bf16.msra.mxu0 %v1070
    %1561 = vmatprep.subr.bf16.mxu0 0
    %1562 = vmatpush1.bf16.msra.mxu0 0
    %1563 = vmatprep.subr.bf16.mxu0 0
    %1564 = vmatpush1.bf16.msra.mxu0 0
    %1565 = vmatprep.subr.bf16.mxu0 0
    %1566 = vmatpush1.bf16.msra.mxu0 0
    %1567 = vmatprep.subr.bf16.mxu0 0
    %1568 = vmatpush1.bf16.msra.mxu0 0
    %1569 = vmatprep.subr.bf16.mxu0 0
    %1570 = vmatpush1.bf16.msra.mxu0 0
    %1571 = vmatprep.subr.bf16.mxu0 0
    %1572 = vmatpush1.bf16.msra.mxu0 0
    %1573 = vmatprep.subr.bf16.mxu0 0
    %1574 = vmatpush1.bf16.msra.mxu0 0
    %1575 = vmatprep.subr.bf16.mxu0 0
    %1576 = vmatpush1.bf16.msra.mxu0 0
    %1577 = vmatprep.subr.bf16.mxu0 0
    %1578 = vmatpush1.bf16.msra.mxu0 0
    %1579 = vmatprep.subr.bf16.mxu0 0
    %1580 = vmatpush1.bf16.msra.mxu0 0
    %1581 = vmatprep.subr.bf16.mxu0 0
    %1582 = vmatpush1.bf16.msra.mxu0 0
    %1583 = vmatprep.subr.bf16.mxu0 0
    %1584 = vmatpush1.bf16.msra.mxu0 0
    %1585 = vmatprep.subr.bf16.mxu0 0
    %1586 = vmatpush1.bf16.msra.mxu0 0
    %1587 = vmatprep.subr.bf16.mxu0 0
    %1588 = vmatpush1.bf16.msra.mxu0 0
    %1589 = vmatprep.subr.bf16.mxu0 0
    %1590 = vmatpush1.bf16.msra.mxu0 0
    %1591 = vmatprep.mubr.bf16.mxu0 0
    %1592 = vmatmul.mubr.bf16.gmra.mrb[0].mxu0 %v1270
    %v1593 = vpop.f32.mrb[0].mxu0
    %v1594 = vadd.f32 %v1553, %v1593
    %v1595 = vpop.f32.mrb[0].mxu0
    %v1596 = vadd.f32 %v1555, %v1595
    %v1597 = vpop.f32.mrb[0].mxu0
    %v1598 = vpop.f32.mrb[0].mxu0
    %1599 = vdwg.mxu0
    %v1600 = vmax.f32 %v1430, 0.0
    %v1601 = vmax.f32 %v1432, 0.0
    %v1602 = vmax.f32 %v1594, 0.0
    %v1603 = vmax.f32 %v1596, 0.0
    %v1604 = vpack.c.bf16 %v1600, %v1600
    %v1605 = vpack.c.bf16 %v1601, %v1601
    %v1606 = vpack.c.bf16 %v1602, %v1602
    %v1607 = vpack.c.bf16 %v1603, %v1603
    %v1612 = vunpack.c.l.b16 %v1604
    %v1613 = vunpack.c.l.b16 %v1605
    %v1614 = vunpack.c.l.b16 %v1606
    %v1615 = vunpack.c.l.b16 %v1607
    %v1616 = vpack.c.b16 %v1613, %v1612
    %v1617 = vpack.c.b16 %v1615, %v1614
    %1620 = vst [vmem:[#allocation2] sm:$0xff] %v1616
    %1621 = vst [vmem:[#allocation2 + $0x8] sm:$0xff] %v1617
    %v1622 = vld [vmem:[#allocation2] sm:$0xff]
    %v1623 = vld [vmem:[#allocation2 + $0x8] sm:$0xff]
    %v1624 = vld [vmem:[#allocation6] sm:$0xff]
    %v1625 = vld [vmem:[#allocation6 + $0x8] sm:$0xff]
    %v1626 = vld [vmem:[#allocation6 + $0x10] sm:$0xff]
    %v1627 = vld [vmem:[#allocation6 + $0x18] sm:$0xff]
    %v1628 = vld [vmem:[#allocation6 + $0x20] sm:$0xff]
    %v1629 = vld [vmem:[#allocation6 + $0x28] sm:$0xff]
    %v1630 = vld [vmem:[#allocation6 + $0x30] sm:$0xff]
    %v1631 = vld [vmem:[#allocation6 + $0x38] sm:$0xff]
    %v1632 = vld [vmem:[#allocation6 + $0x40] sm:$0xff]
    %v1633 = vld [vmem:[#allocation6 + $0x48] sm:$0xff]
    %v1634 = vld [vmem:[#allocation6 + $0x50] sm:$0xff]
    %v1635 = vld [vmem:[#allocation6 + $0x58] sm:$0xff]
    %v1636 = vld [vmem:[#allocation6 + $0x60] sm:$0xff]
    %v1637 = vld [vmem:[#allocation6 + $0x68] sm:$0xff]
    %v1638 = vld [vmem:[#allocation6 + $0x70] sm:$0xff]
    %v1639 = vld [vmem:[#allocation6 + $0x78] sm:$0xff]
    %v1640 = vld [vmem:[#allocation6 + $0x80] sm:$0xff]
    %v1641 = vld [vmem:[#allocation6 + $0x88] sm:$0xff]
    %v1642 = vld [vmem:[#allocation6 + $0x90] sm:$0xff]
    %v1643 = vld [vmem:[#allocation6 + $0x98] sm:$0xff]
    %v1644 = vld [vmem:[#allocation6 + $0xa0] sm:$0xff]
    %v1645 = vld [vmem:[#allocation6 + $0xa8] sm:$0xff]
    %v1646 = vld [vmem:[#allocation6 + $0xb0] sm:$0xff]
    %v1647 = vld [vmem:[#allocation6 + $0xb8] sm:$0xff]
    %v1648 = vld [vmem:[#allocation6 + $0xc0] sm:$0xff]
    %v1649 = vld [vmem:[#allocation6 + $0xc8] sm:$0xff]
    %v1650 = vld [vmem:[#allocation6 + $0xd0] sm:$0xff]
    %v1651 = vld [vmem:[#allocation6 + $0xd8] sm:$0xff]
    %v1652 = vld [vmem:[#allocation6 + $0xe0] sm:$0xff]
    %v1653 = vld [vmem:[#allocation6 + $0xe8] sm:$0xff]
    %v1654 = vld [vmem:[#allocation6 + $0xf0] sm:$0xff]
    %v1655 = vld [vmem:[#allocation6 + $0xf8] sm:$0xff]
    %v1656 = vld [vmem:[#allocation6 + $0x100] sm:$0xff]
    %v1657 = vld [vmem:[#allocation6 + $0x108] sm:$0xff]
    %v1658 = vld [vmem:[#allocation6 + $0x110] sm:$0xff]
    %v1659 = vld [vmem:[#allocation6 + $0x118] sm:$0xff]
    %v1660 = vld [vmem:[#allocation6 + $0x120] sm:$0xff]
    %v1661 = vld [vmem:[#allocation6 + $0x128] sm:$0xff]
    %v1662 = vld [vmem:[#allocation6 + $0x130] sm:$0xff]
    %v1663 = vld [vmem:[#allocation6 + $0x138] sm:$0xff]
    %v1664 = vld [vmem:[#allocation6 + $0x140] sm:$0xff]
    %v1665 = vld [vmem:[#allocation6 + $0x148] sm:$0xff]
    %v1666 = vld [vmem:[#allocation6 + $0x150] sm:$0xff]
    %v1667 = vld [vmem:[#allocation6 + $0x158] sm:$0xff]
    %v1668 = vld [vmem:[#allocation6 + $0x160] sm:$0xff]
    %v1669 = vld [vmem:[#allocation6 + $0x168] sm:$0xff]
    %v1670 = vld [vmem:[#allocation6 + $0x170] sm:$0xff]
    %v1671 = vld [vmem:[#allocation6 + $0x178] sm:$0xff]
    %v1672 = vld [vmem:[#allocation6 + $0x180] sm:$0xff]
    %v1673 = vld [vmem:[#allocation6 + $0x188] sm:$0xff]
    %v1674 = vld [vmem:[#allocation6 + $0x190] sm:$0xff]
    %v1675 = vld [vmem:[#allocation6 + $0x198] sm:$0xff]
    %v1676 = vld [vmem:[#allocation6 + $0x1a0] sm:$0xff]
    %v1677 = vld [vmem:[#allocation6 + $0x1a8] sm:$0xff]
    %v1678 = vld [vmem:[#allocation6 + $0x1b0] sm:$0xff]
    %v1679 = vld [vmem:[#allocation6 + $0x1b8] sm:$0xff]
    %v1680 = vld [vmem:[#allocation6 + $0x1c0] sm:$0xff]
    %v1681 = vld [vmem:[#allocation6 + $0x1c8] sm:$0xff]
    %v1682 = vld [vmem:[#allocation6 + $0x1d0] sm:$0xff]
    %v1683 = vld [vmem:[#allocation6 + $0x1d8] sm:$0xff]
    %v1684 = vld [vmem:[#allocation6 + $0x1e0] sm:$0xff]
    %v1685 = vld [vmem:[#allocation6 + $0x1e8] sm:$0xff]
    %v1686 = vld [vmem:[#allocation6 + $0x1f0] sm:$0xff]
    %v1687 = vld [vmem:[#allocation6 + $0x1f8] sm:$0xff]
    %v1688 = vld [vmem:[#allocation6 + $0x200] sm:$0xff]
    %v1689 = vld [vmem:[#allocation6 + $0x208] sm:$0xff]
    %v1690 = vld [vmem:[#allocation6 + $0x210] sm:$0xff]
    %v1691 = vld [vmem:[#allocation6 + $0x218] sm:$0xff]
    %v1692 = vld [vmem:[#allocation6 + $0x220] sm:$0xff]
    %v1693 = vld [vmem:[#allocation6 + $0x228] sm:$0xff]
    %v1694 = vld [vmem:[#allocation6 + $0x230] sm:$0xff]
    %v1695 = vld [vmem:[#allocation6 + $0x238] sm:$0xff]
    %v1696 = vld [vmem:[#allocation6 + $0x240] sm:$0xff]
    %v1697 = vld [vmem:[#allocation6 + $0x248] sm:$0xff]
    %v1698 = vld [vmem:[#allocation6 + $0x250] sm:$0xff]
    %v1699 = vld [vmem:[#allocation6 + $0x258] sm:$0xff]
    %v1700 = vld [vmem:[#allocation6 + $0x260] sm:$0xff]
    %v1701 = vld [vmem:[#allocation6 + $0x268] sm:$0xff]
    %v1702 = vld [vmem:[#allocation6 + $0x270] sm:$0xff]
    %v1703 = vld [vmem:[#allocation6 + $0x278] sm:$0xff]
    %v1704 = vld [vmem:[#allocation6 + $0x280] sm:$0xff]
    %v1705 = vld [vmem:[#allocation6 + $0x288] sm:$0xff]
    %v1706 = vld [vmem:[#allocation6 + $0x290] sm:$0xff]
    %v1707 = vld [vmem:[#allocation6 + $0x298] sm:$0xff]
    %v1708 = vld [vmem:[#allocation6 + $0x2a0] sm:$0xff]
    %v1709 = vld [vmem:[#allocation6 + $0x2a8] sm:$0xff]
    %v1710 = vld [vmem:[#allocation6 + $0x2b0] sm:$0xff]
    %v1711 = vld [vmem:[#allocation6 + $0x2b8] sm:$0xff]
    %v1712 = vld [vmem:[#allocation6 + $0x2c0] sm:$0xff]
    %v1713 = vld [vmem:[#allocation6 + $0x2c8] sm:$0xff]
    %v1714 = vld [vmem:[#allocation6 + $0x2d0] sm:$0xff]
    %v1715 = vld [vmem:[#allocation6 + $0x2d8] sm:$0xff]
    %v1716 = vld [vmem:[#allocation6 + $0x2e0] sm:$0xff]
    %v1717 = vld [vmem:[#allocation6 + $0x2e8] sm:$0xff]
    %v1718 = vld [vmem:[#allocation6 + $0x2f0] sm:$0xff]
    %v1719 = vld [vmem:[#allocation6 + $0x2f8] sm:$0xff]
    %v1720 = vld [vmem:[#allocation6 + $0x300] sm:$0xff]
    %v1721 = vld [vmem:[#allocation6 + $0x308] sm:$0xff]
    %v1722 = vld [vmem:[#allocation6 + $0x310] sm:$0xff]
    %v1723 = vld [vmem:[#allocation6 + $0x318] sm:$0xff]
    %v1724 = vld [vmem:[#allocation6 + $0x320] sm:$0xff]
    %v1725 = vld [vmem:[#allocation6 + $0x328] sm:$0xff]
    %v1726 = vld [vmem:[#allocation6 + $0x330] sm:$0xff]
    %v1727 = vld [vmem:[#allocation6 + $0x338] sm:$0xff]
    %v1728 = vld [vmem:[#allocation6 + $0x340] sm:$0xff]
    %v1729 = vld [vmem:[#allocation6 + $0x348] sm:$0xff]
    %v1730 = vld [vmem:[#allocation6 + $0x350] sm:$0xff]
    %v1731 = vld [vmem:[#allocation6 + $0x358] sm:$0xff]
    %v1732 = vld [vmem:[#allocation6 + $0x360] sm:$0xff]
    %v1733 = vld [vmem:[#allocation6 + $0x368] sm:$0xff]
    %v1734 = vld [vmem:[#allocation6 + $0x370] sm:$0xff]
    %v1735 = vld [vmem:[#allocation6 + $0x378] sm:$0xff]
    %v1736 = vld [vmem:[#allocation6 + $0x380] sm:$0xff]
    %v1737 = vld [vmem:[#allocation6 + $0x388] sm:$0xff]
    %v1738 = vld [vmem:[#allocation6 + $0x390] sm:$0xff]
    %v1739 = vld [vmem:[#allocation6 + $0x398] sm:$0xff]
    %v1740 = vld [vmem:[#allocation6 + $0x3a0] sm:$0xff]
    %v1741 = vld [vmem:[#allocation6 + $0x3a8] sm:$0xff]
    %v1742 = vld [vmem:[#allocation6 + $0x3b0] sm:$0xff]
    %v1743 = vld [vmem:[#allocation6 + $0x3b8] sm:$0xff]
    %v1744 = vld [vmem:[#allocation6 + $0x3c0] sm:$0xff]
    %v1745 = vld [vmem:[#allocation6 + $0x3c8] sm:$0xff]
    %v1746 = vld [vmem:[#allocation6 + $0x3d0] sm:$0xff]
    %v1747 = vld [vmem:[#allocation6 + $0x3d8] sm:$0xff]
    %v1748 = vld [vmem:[#allocation6 + $0x3e0] sm:$0xff]
    %v1749 = vld [vmem:[#allocation6 + $0x3e8] sm:$0xff]
    %v1750 = vld [vmem:[#allocation6 + $0x3f0] sm:$0xff]
    %v1751 = vld [vmem:[#allocation6 + $0x3f8] sm:$0xff]
    %v1752 = vld [vmem:[%s4] sm:$0xf]
    %v1754 = vlaneseq
    %v1755 = vshrl.u32 %v1754, 7
    %v1756 = vsub.s32 0, %v1755
    %v1757 = vrot.slane %v1752, %v1756
    %v1758 = vlaneseq
    %v1759 = vshrl.u32 %v1758, 7
    %v1760 = vsub.s32 1, %v1759
    %v1761 = vrot.slane %v1752, %v1760
    %v1762 = vlaneseq
    %v1763 = vshrl.u32 %v1762, 7
    %v1764 = vsub.s32 2, %v1763
    %v1765 = vrot.slane %v1752, %v1764
    %v1766 = vlaneseq
    %v1767 = vshrl.u32 %v1766, 7
    %v1768 = vsub.s32 3, %v1767
    %v1769 = vrot.slane %v1752, %v1768
    %v1776 = vunpack.c.l.b16 %v1622
    %v1777 = vunpack.c.h.b16 %v1622
    %v1778 = vunpack.c.l.b16 %v1623
    %v1779 = vunpack.c.h.b16 %v1623
    %v1780 = vpack.c.b16 %v1776, %v1776
    %v1781 = vpack.c.b16 %v1777, %v1777
    %v1782 = vpack.c.b16 %v1778, %v1778
    %v1783 = vpack.c.b16 %v1779, %v1779
    %v1916 = vunpack.c.l.b16 %v1624
    %v1917 = vunpack.c.h.b16 %v1624
    %v1918 = vunpack.c.l.b16 %v1625
    %v1919 = vunpack.c.h.b16 %v1625
    %v1920 = vunpack.c.l.b16 %v1626
    %v1921 = vunpack.c.h.b16 %v1626
    %v1922 = vunpack.c.l.b16 %v1627
    %v1923 = vunpack.c.h.b16 %v1627
    %v1924 = vunpack.c.l.b16 %v1628
    %v1925 = vunpack.c.h.b16 %v1628
    %v1926 = vunpack.c.l.b16 %v1629
    %v1927 = vunpack.c.h.b16 %v1629
    %v1928 = vunpack.c.l.b16 %v1630
    %v1929 = vunpack.c.h.b16 %v1630
    %v1930 = vunpack.c.l.b16 %v1631
    %v1931 = vunpack.c.h.b16 %v1631
    %v1932 = vunpack.c.l.b16 %v1632
    %v1933 = vunpack.c.h.b16 %v1632
    %v1934 = vunpack.c.l.b16 %v1633
    %v1935 = vunpack.c.h.b16 %v1633
    %v1936 = vunpack.c.l.b16 %v1634
    %v1937 = vunpack.c.h.b16 %v1634
    %v1938 = vunpack.c.l.b16 %v1635
    %v1939 = vunpack.c.h.b16 %v1635
    %v1940 = vunpack.c.l.b16 %v1636
    %v1941 = vunpack.c.h.b16 %v1636
    %v1942 = vunpack.c.l.b16 %v1637
    %v1943 = vunpack.c.h.b16 %v1637
    %v1944 = vunpack.c.l.b16 %v1638
    %v1945 = vunpack.c.h.b16 %v1638
    %v1946 = vunpack.c.l.b16 %v1639
    %v1947 = vunpack.c.h.b16 %v1639
    %v1948 = vunpack.c.l.b16 %v1640
    %v1949 = vunpack.c.h.b16 %v1640
    %v1950 = vunpack.c.l.b16 %v1641
    %v1951 = vunpack.c.h.b16 %v1641
    %v1952 = vunpack.c.l.b16 %v1642
    %v1953 = vunpack.c.h.b16 %v1642
    %v1954 = vunpack.c.l.b16 %v1643
    %v1955 = vunpack.c.h.b16 %v1643
    %v1956 = vunpack.c.l.b16 %v1644
    %v1957 = vunpack.c.h.b16 %v1644
    %v1958 = vunpack.c.l.b16 %v1645
    %v1959 = vunpack.c.h.b16 %v1645
    %v1960 = vunpack.c.l.b16 %v1646
    %v1961 = vunpack.c.h.b16 %v1646
    %v1962 = vunpack.c.l.b16 %v1647
    %v1963 = vunpack.c.h.b16 %v1647
    %v1964 = vunpack.c.l.b16 %v1648
    %v1965 = vunpack.c.h.b16 %v1648
    %v1966 = vunpack.c.l.b16 %v1649
    %v1967 = vunpack.c.h.b16 %v1649
    %v1968 = vunpack.c.l.b16 %v1650
    %v1969 = vunpack.c.h.b16 %v1650
    %v1970 = vunpack.c.l.b16 %v1651
    %v1971 = vunpack.c.h.b16 %v1651
    %v1972 = vunpack.c.l.b16 %v1652
    %v1973 = vunpack.c.h.b16 %v1652
    %v1974 = vunpack.c.l.b16 %v1653
    %v1975 = vunpack.c.h.b16 %v1653
    %v1976 = vunpack.c.l.b16 %v1654
    %v1977 = vunpack.c.h.b16 %v1654
    %v1978 = vunpack.c.l.b16 %v1655
    %v1979 = vunpack.c.h.b16 %v1655
    %v1980 = vunpack.c.l.b16 %v1656
    %v1981 = vunpack.c.h.b16 %v1656
    %v1982 = vunpack.c.l.b16 %v1657
    %v1983 = vunpack.c.h.b16 %v1657
    %v1984 = vunpack.c.l.b16 %v1658
    %v1985 = vunpack.c.h.b16 %v1658
    %v1986 = vunpack.c.l.b16 %v1659
    %v1987 = vunpack.c.h.b16 %v1659
    %v1988 = vunpack.c.l.b16 %v1660
    %v1989 = vunpack.c.h.b16 %v1660
    %v1990 = vunpack.c.l.b16 %v1661
    %v1991 = vunpack.c.h.b16 %v1661
    %v1992 = vunpack.c.l.b16 %v1662
    %v1993 = vunpack.c.h.b16 %v1662
    %v1994 = vunpack.c.l.b16 %v1663
    %v1995 = vunpack.c.h.b16 %v1663
    %v1996 = vunpack.c.l.b16 %v1664
    %v1997 = vunpack.c.h.b16 %v1664
    %v1998 = vunpack.c.l.b16 %v1665
    %v1999 = vunpack.c.h.b16 %v1665
    %v2000 = vunpack.c.l.b16 %v1666
    %v2001 = vunpack.c.h.b16 %v1666
    %v2002 = vunpack.c.l.b16 %v1667
    %v2003 = vunpack.c.h.b16 %v1667
    %v2004 = vunpack.c.l.b16 %v1668
    %v2005 = vunpack.c.h.b16 %v1668
    %v2006 = vunpack.c.l.b16 %v1669
    %v2007 = vunpack.c.h.b16 %v1669
    %v2008 = vunpack.c.l.b16 %v1670
    %v2009 = vunpack.c.h.b16 %v1670
    %v2010 = vunpack.c.l.b16 %v1671
    %v2011 = vunpack.c.h.b16 %v1671
    %v2012 = vunpack.c.l.b16 %v1672
    %v2013 = vunpack.c.h.b16 %v1672
    %v2014 = vunpack.c.l.b16 %v1673
    %v2015 = vunpack.c.h.b16 %v1673
    %v2016 = vunpack.c.l.b16 %v1674
    %v2017 = vunpack.c.h.b16 %v1674
    %v2018 = vunpack.c.l.b16 %v1675
    %v2019 = vunpack.c.h.b16 %v1675
    %v2020 = vunpack.c.l.b16 %v1676
    %v2021 = vunpack.c.h.b16 %v1676
    %v2022 = vunpack.c.l.b16 %v1677
    %v2023 = vunpack.c.h.b16 %v1677
    %v2024 = vunpack.c.l.b16 %v1678
    %v2025 = vunpack.c.h.b16 %v1678
    %v2026 = vunpack.c.l.b16 %v1679
    %v2027 = vunpack.c.h.b16 %v1679
    %v2028 = vunpack.c.l.b16 %v1680
    %v2029 = vunpack.c.h.b16 %v1680
    %v2030 = vunpack.c.l.b16 %v1681
    %v2031 = vunpack.c.h.b16 %v1681
    %v2032 = vunpack.c.l.b16 %v1682
    %v2033 = vunpack.c.h.b16 %v1682
    %v2034 = vunpack.c.l.b16 %v1683
    %v2035 = vunpack.c.h.b16 %v1683
    %v2036 = vunpack.c.l.b16 %v1684
    %v2037 = vunpack.c.h.b16 %v1684
    %v2038 = vunpack.c.l.b16 %v1685
    %v2039 = vunpack.c.h.b16 %v1685
    %v2040 = vunpack.c.l.b16 %v1686
    %v2041 = vunpack.c.h.b16 %v1686
    %v2042 = vunpack.c.l.b16 %v1687
    %v2043 = vunpack.c.h.b16 %v1687
    %v2044 = vunpack.c.l.b16 %v1688
    %v2045 = vunpack.c.h.b16 %v1688
    %v2046 = vunpack.c.l.b16 %v1689
    %v2047 = vunpack.c.h.b16 %v1689
    %v2048 = vunpack.c.l.b16 %v1690
    %v2049 = vunpack.c.h.b16 %v1690
    %v2050 = vunpack.c.l.b16 %v1691
    %v2051 = vunpack.c.h.b16 %v1691
    %v2052 = vunpack.c.l.b16 %v1692
    %v2053 = vunpack.c.h.b16 %v1692
    %v2054 = vunpack.c.l.b16 %v1693
    %v2055 = vunpack.c.h.b16 %v1693
    %v2056 = vunpack.c.l.b16 %v1694
    %v2057 = vunpack.c.h.b16 %v1694
    %v2058 = vunpack.c.l.b16 %v1695
    %v2059 = vunpack.c.h.b16 %v1695
    %v2060 = vunpack.c.l.b16 %v1696
    %v2061 = vunpack.c.h.b16 %v1696
    %v2062 = vunpack.c.l.b16 %v1697
    %v2063 = vunpack.c.h.b16 %v1697
    %v2064 = vunpack.c.l.b16 %v1698
    %v2065 = vunpack.c.h.b16 %v1698
    %v2066 = vunpack.c.l.b16 %v1699
    %v2067 = vunpack.c.h.b16 %v1699
    %v2068 = vunpack.c.l.b16 %v1700
    %v2069 = vunpack.c.h.b16 %v1700
    %v2070 = vunpack.c.l.b16 %v1701
    %v2071 = vunpack.c.h.b16 %v1701
    %v2072 = vunpack.c.l.b16 %v1702
    %v2073 = vunpack.c.h.b16 %v1702
    %v2074 = vunpack.c.l.b16 %v1703
    %v2075 = vunpack.c.h.b16 %v1703
    %v2076 = vunpack.c.l.b16 %v1704
    %v2077 = vunpack.c.h.b16 %v1704
    %v2078 = vunpack.c.l.b16 %v1705
    %v2079 = vunpack.c.h.b16 %v1705
    %v2080 = vunpack.c.l.b16 %v1706
    %v2081 = vunpack.c.h.b16 %v1706
    %v2082 = vunpack.c.l.b16 %v1707
    %v2083 = vunpack.c.h.b16 %v1707
    %v2084 = vunpack.c.l.b16 %v1708
    %v2085 = vunpack.c.h.b16 %v1708
    %v2086 = vunpack.c.l.b16 %v1709
    %v2087 = vunpack.c.h.b16 %v1709
    %v2088 = vunpack.c.l.b16 %v1710
    %v2089 = vunpack.c.h.b16 %v1710
    %v2090 = vunpack.c.l.b16 %v1711
    %v2091 = vunpack.c.h.b16 %v1711
    %v2092 = vunpack.c.l.b16 %v1712
    %v2093 = vunpack.c.h.b16 %v1712
    %v2094 = vunpack.c.l.b16 %v1713
    %v2095 = vunpack.c.h.b16 %v1713
    %v2096 = vunpack.c.l.b16 %v1714
    %v2097 = vunpack.c.h.b16 %v1714
    %v2098 = vunpack.c.l.b16 %v1715
    %v2099 = vunpack.c.h.b16 %v1715
    %v2100 = vunpack.c.l.b16 %v1716
    %v2101 = vunpack.c.h.b16 %v1716
    %v2102 = vunpack.c.l.b16 %v1717
    %v2103 = vunpack.c.h.b16 %v1717
    %v2104 = vunpack.c.l.b16 %v1718
    %v2105 = vunpack.c.h.b16 %v1718
    %v2106 = vunpack.c.l.b16 %v1719
    %v2107 = vunpack.c.h.b16 %v1719
    %v2108 = vunpack.c.l.b16 %v1720
    %v2109 = vunpack.c.h.b16 %v1720
    %v2110 = vunpack.c.l.b16 %v1721
    %v2111 = vunpack.c.h.b16 %v1721
    %v2112 = vunpack.c.l.b16 %v1722
    %v2113 = vunpack.c.h.b16 %v1722
    %v2114 = vunpack.c.l.b16 %v1723
    %v2115 = vunpack.c.h.b16 %v1723
    %v2116 = vunpack.c.l.b16 %v1724
    %v2117 = vunpack.c.h.b16 %v1724
    %v2118 = vunpack.c.l.b16 %v1725
    %v2119 = vunpack.c.h.b16 %v1725
    %v2120 = vunpack.c.l.b16 %v1726
    %v2121 = vunpack.c.h.b16 %v1726
    %v2122 = vunpack.c.l.b16 %v1727
    %v2123 = vunpack.c.h.b16 %v1727
    %v2124 = vunpack.c.l.b16 %v1728
    %v2125 = vunpack.c.h.b16 %v1728
    %v2126 = vunpack.c.l.b16 %v1729
    %v2127 = vunpack.c.h.b16 %v1729
    %v2128 = vunpack.c.l.b16 %v1730
    %v2129 = vunpack.c.h.b16 %v1730
    %v2130 = vunpack.c.l.b16 %v1731
    %v2131 = vunpack.c.h.b16 %v1731
    %v2132 = vunpack.c.l.b16 %v1732
    %v2133 = vunpack.c.h.b16 %v1732
    %v2134 = vunpack.c.l.b16 %v1733
    %v2135 = vunpack.c.h.b16 %v1733
    %v2136 = vunpack.c.l.b16 %v1734
    %v2137 = vunpack.c.h.b16 %v1734
    %v2138 = vunpack.c.l.b16 %v1735
    %v2139 = vunpack.c.h.b16 %v1735
    %v2140 = vunpack.c.l.b16 %v1736
    %v2141 = vunpack.c.h.b16 %v1736
    %v2142 = vunpack.c.l.b16 %v1737
    %v2143 = vunpack.c.h.b16 %v1737
    %v2144 = vunpack.c.l.b16 %v1738
    %v2145 = vunpack.c.h.b16 %v1738
    %v2146 = vunpack.c.l.b16 %v1739
    %v2147 = vunpack.c.h.b16 %v1739
    %v2148 = vunpack.c.l.b16 %v1740
    %v2149 = vunpack.c.h.b16 %v1740
    %v2150 = vunpack.c.l.b16 %v1741
    %v2151 = vunpack.c.h.b16 %v1741
    %v2152 = vunpack.c.l.b16 %v1742
    %v2153 = vunpack.c.h.b16 %v1742
    %v2154 = vunpack.c.l.b16 %v1743
    %v2155 = vunpack.c.h.b16 %v1743
    %v2156 = vunpack.c.l.b16 %v1744
    %v2157 = vunpack.c.h.b16 %v1744
    %v2158 = vunpack.c.l.b16 %v1745
    %v2159 = vunpack.c.h.b16 %v1745
    %v2160 = vunpack.c.l.b16 %v1746
    %v2161 = vunpack.c.h.b16 %v1746
    %v2162 = vunpack.c.l.b16 %v1747
    %v2163 = vunpack.c.h.b16 %v1747
    %v2164 = vunpack.c.l.b16 %v1748
    %v2165 = vunpack.c.h.b16 %v1748
    %v2166 = vunpack.c.l.b16 %v1749
    %v2167 = vunpack.c.h.b16 %v1749
    %v2168 = vunpack.c.l.b16 %v1750
    %v2169 = vunpack.c.h.b16 %v1750
    %v2170 = vunpack.c.l.b16 %v1751
    %v2171 = vunpack.c.h.b16 %v1751
    %v2172 = vpack.c.b16 %v1920, %v1916
    %v2173 = vpack.c.b16 %v1921, %v1917
    %v2174 = vpack.c.b16 %v1922, %v1918
    %v2175 = vpack.c.b16 %v1923, %v1919
    %v2176 = vpack.c.b16 %v1928, %v1924
    %v2177 = vpack.c.b16 %v1929, %v1925
    %v2178 = vpack.c.b16 %v1930, %v1926
    %v2179 = vpack.c.b16 %v1931, %v1927
    %v2180 = vpack.c.b16 %v1936, %v1932
    %v2181 = vpack.c.b16 %v1937, %v1933
    %v2182 = vpack.c.b16 %v1938, %v1934
    %v2183 = vpack.c.b16 %v1939, %v1935
    %v2184 = vpack.c.b16 %v1944, %v1940
    %v2185 = vpack.c.b16 %v1945, %v1941
    %v2186 = vpack.c.b16 %v1946, %v1942
    %v2187 = vpack.c.b16 %v1947, %v1943
    %v2188 = vpack.c.b16 %v1952, %v1948
    %v2189 = vpack.c.b16 %v1953, %v1949
    %v2190 = vpack.c.b16 %v1954, %v1950
    %v2191 = vpack.c.b16 %v1955, %v1951
    %v2192 = vpack.c.b16 %v1960, %v1956
    %v2193 = vpack.c.b16 %v1961, %v1957
    %v2194 = vpack.c.b16 %v1962, %v1958
    %v2195 = vpack.c.b16 %v1963, %v1959
    %v2196 = vpack.c.b16 %v1968, %v1964
    %v2197 = vpack.c.b16 %v1969, %v1965
    %v2198 = vpack.c.b16 %v1970, %v1966
    %v2199 = vpack.c.b16 %v1971, %v1967
    %v2200 = vpack.c.b16 %v1976, %v1972
    %v2201 = vpack.c.b16 %v1977, %v1973
    %v2202 = vpack.c.b16 %v1978, %v1974
    %v2203 = vpack.c.b16 %v1979, %v1975
    %v2204 = vpack.c.b16 %v1984, %v1980
    %v2205 = vpack.c.b16 %v1985, %v1981
    %v2206 = vpack.c.b16 %v1986, %v1982
    %v2207 = vpack.c.b16 %v1987, %v1983
    %v2208 = vpack.c.b16 %v1992, %v1988
    %v2209 = vpack.c.b16 %v1993, %v1989
    %v2210 = vpack.c.b16 %v1994, %v1990
    %v2211 = vpack.c.b16 %v1995, %v1991
    %v2212 = vpack.c.b16 %v2000, %v1996
    %v2213 = vpack.c.b16 %v2001, %v1997
    %v2214 = vpack.c.b16 %v2002, %v1998
    %v2215 = vpack.c.b16 %v2003, %v1999
    %v2216 = vpack.c.b16 %v2008, %v2004
    %v2217 = vpack.c.b16 %v2009, %v2005
    %v2218 = vpack.c.b16 %v2010, %v2006
    %v2219 = vpack.c.b16 %v2011, %v2007
    %v2220 = vpack.c.b16 %v2016, %v2012
    %v2221 = vpack.c.b16 %v2017, %v2013
    %v2222 = vpack.c.b16 %v2018, %v2014
    %v2223 = vpack.c.b16 %v2019, %v2015
    %v2224 = vpack.c.b16 %v2024, %v2020
    %v2225 = vpack.c.b16 %v2025, %v2021
    %v2226 = vpack.c.b16 %v2026, %v2022
    %v2227 = vpack.c.b16 %v2027, %v2023
    %v2228 = vpack.c.b16 %v2032, %v2028
    %v2229 = vpack.c.b16 %v2033, %v2029
    %v2230 = vpack.c.b16 %v2034, %v2030
    %v2231 = vpack.c.b16 %v2035, %v2031
    %v2232 = vpack.c.b16 %v2040, %v2036
    %v2233 = vpack.c.b16 %v2041, %v2037
    %v2234 = vpack.c.b16 %v2042, %v2038
    %v2235 = vpack.c.b16 %v2043, %v2039
    %v2236 = vpack.c.b16 %v2048, %v2044
    %v2237 = vpack.c.b16 %v2049, %v2045
    %v2238 = vpack.c.b16 %v2050, %v2046
    %v2239 = vpack.c.b16 %v2051, %v2047
    %v2240 = vpack.c.b16 %v2056, %v2052
    %v2241 = vpack.c.b16 %v2057, %v2053
    %v2242 = vpack.c.b16 %v2058, %v2054
    %v2243 = vpack.c.b16 %v2059, %v2055
    %v2244 = vpack.c.b16 %v2064, %v2060
    %v2245 = vpack.c.b16 %v2065, %v2061
    %v2246 = vpack.c.b16 %v2066, %v2062
    %v2247 = vpack.c.b16 %v2067, %v2063
    %v2248 = vpack.c.b16 %v2072, %v2068
    %v2249 = vpack.c.b16 %v2073, %v2069
    %v2250 = vpack.c.b16 %v2074, %v2070
    %v2251 = vpack.c.b16 %v2075, %v2071
    %v2252 = vpack.c.b16 %v2080, %v2076
    %v2253 = vpack.c.b16 %v2081, %v2077
    %v2254 = vpack.c.b16 %v2082, %v2078
    %v2255 = vpack.c.b16 %v2083, %v2079
    %v2256 = vpack.c.b16 %v2088, %v2084
    %v2257 = vpack.c.b16 %v2089, %v2085
    %v2258 = vpack.c.b16 %v2090, %v2086
    %v2259 = vpack.c.b16 %v2091, %v2087
    %v2260 = vpack.c.b16 %v2096, %v2092
    %v2261 = vpack.c.b16 %v2097, %v2093
    %v2262 = vpack.c.b16 %v2098, %v2094
    %v2263 = vpack.c.b16 %v2099, %v2095
    %v2264 = vpack.c.b16 %v2104, %v2100
    %v2265 = vpack.c.b16 %v2105, %v2101
    %v2266 = vpack.c.b16 %v2106, %v2102
    %v2267 = vpack.c.b16 %v2107, %v2103
    %v2268 = vpack.c.b16 %v2112, %v2108
    %v2269 = vpack.c.b16 %v2113, %v2109
    %v2270 = vpack.c.b16 %v2114, %v2110
    %v2271 = vpack.c.b16 %v2115, %v2111
    %v2272 = vpack.c.b16 %v2120, %v2116
    %v2273 = vpack.c.b16 %v2121, %v2117
    %v2274 = vpack.c.b16 %v2122, %v2118
    %v2275 = vpack.c.b16 %v2123, %v2119
    %v2276 = vpack.c.b16 %v2128, %v2124
    %v2277 = vpack.c.b16 %v2129, %v2125
    %v2278 = vpack.c.b16 %v2130, %v2126
    %v2279 = vpack.c.b16 %v2131, %v2127
    %v2280 = vpack.c.b16 %v2136, %v2132
    %v2281 = vpack.c.b16 %v2137, %v2133
    %v2282 = vpack.c.b16 %v2138, %v2134
    %v2283 = vpack.c.b16 %v2139, %v2135
    %v2284 = vpack.c.b16 %v2144, %v2140
    %v2285 = vpack.c.b16 %v2145, %v2141
    %v2286 = vpack.c.b16 %v2146, %v2142
    %v2287 = vpack.c.b16 %v2147, %v2143
    %v2288 = vpack.c.b16 %v2152, %v2148
    %v2289 = vpack.c.b16 %v2153, %v2149
    %v2290 = vpack.c.b16 %v2154, %v2150
    %v2291 = vpack.c.b16 %v2155, %v2151
    %v2292 = vpack.c.b16 %v2160, %v2156
    %v2293 = vpack.c.b16 %v2161, %v2157
    %v2294 = vpack.c.b16 %v2162, %v2158
    %v2295 = vpack.c.b16 %v2163, %v2159
    %v2296 = vpack.c.b16 %v2168, %v2164
    %v2297 = vpack.c.b16 %v2169, %v2165
    %v2298 = vpack.c.b16 %v2170, %v2166
    %v2299 = vpack.c.b16 %v2171, %v2167
    %2428 = vmatprep.subr.bf16.mxu0 %v2173
    %2429 = vmatpush1.bf16.msra.mxu0 %v2172
    %2430 = vmatprep.subr.bf16.mxu0 %v2177
    %2431 = vmatpush1.bf16.msra.mxu0 %v2176
    %2432 = vmatprep.subr.bf16.mxu0 %v2181
    %2433 = vmatpush1.bf16.msra.mxu0 %v2180
    %2434 = vmatprep.subr.bf16.mxu0 %v2185
    %2435 = vmatpush1.bf16.msra.mxu0 %v2184
    %2436 = vmatprep.subr.bf16.mxu0 %v2189
    %2437 = vmatpush1.bf16.msra.mxu0 %v2188
    %2438 = vmatprep.subr.bf16.mxu0 %v2193
    %2439 = vmatpush1.bf16.msra.mxu0 %v2192
    %2440 = vmatprep.subr.bf16.mxu0 %v2197
    %2441 = vmatpush1.bf16.msra.mxu0 %v2196
    %2442 = vmatprep.subr.bf16.mxu0 %v2201
    %2443 = vmatpush1.bf16.msra.mxu0 %v2200
    %2444 = vmatprep.subr.bf16.mxu0 %v2205
    %2445 = vmatpush1.bf16.msra.mxu0 %v2204
    %2446 = vmatprep.subr.bf16.mxu0 %v2209
    %2447 = vmatpush1.bf16.msra.mxu0 %v2208
    %2448 = vmatprep.subr.bf16.mxu0 %v2213
    %2449 = vmatpush1.bf16.msra.mxu0 %v2212
    %2450 = vmatprep.subr.bf16.mxu0 %v2217
    %2451 = vmatpush1.bf16.msra.mxu0 %v2216
    %2452 = vmatprep.subr.bf16.mxu0 %v2221
    %2453 = vmatpush1.bf16.msra.mxu0 %v2220
    %2454 = vmatprep.subr.bf16.mxu0 %v2225
    %2455 = vmatpush1.bf16.msra.mxu0 %v2224
    %2456 = vmatprep.subr.bf16.mxu0 %v2229
    %2457 = vmatpush1.bf16.msra.mxu0 %v2228
    %2458 = vmatprep.subr.bf16.mxu0 %v2233
    %2459 = vmatpush1.bf16.msra.mxu0 %v2232
    %2460 = vmatprep.mubr.bf16.mxu0 %v1781
    %2461 = vmatmul.mubr.bf16.gmra.mrb[0].mxu0 %v1780
    %v2462 = vpop.f32.mrb[0].mxu0
    %v2463 = vadd.f32 %v1757, %v2462
    %v2464 = vpop.f32.mrb[0].mxu0
    %v2465 = vadd.f32 %v1761, %v2464
    %v2466 = vpop.f32.mrb[0].mxu0
    %v2467 = vpop.f32.mrb[0].mxu0
    %2468 = vdwg.mxu0
    %2469 = vmatprep.subr.bf16.mxu0 %v2237
    %2470 = vmatpush1.bf16.msra.mxu0 %v2236
    %2471 = vmatprep.subr.bf16.mxu0 %v2241
    %2472 = vmatpush1.bf16.msra.mxu0 %v2240
    %2473 = vmatprep.subr.bf16.mxu0 %v2245
    %2474 = vmatpush1.bf16.msra.mxu0 %v2244
    %2475 = vmatprep.subr.bf16.mxu0 %v2249
    %2476 = vmatpush1.bf16.msra.mxu0 %v2248
    %2477 = vmatprep.subr.bf16.mxu0 %v2253
    %2478 = vmatpush1.bf16.msra.mxu0 %v2252
    %2479 = vmatprep.subr.bf16.mxu0 %v2257
    %2480 = vmatpush1.bf16.msra.mxu0 %v2256
    %2481 = vmatprep.subr.bf16.mxu0 %v2261
    %2482 = vmatpush1.bf16.msra.mxu0 %v2260
    %2483 = vmatprep.subr.bf16.mxu0 %v2265
    %2484 = vmatpush1.bf16.msra.mxu0 %v2264
    %2485 = vmatprep.subr.bf16.mxu0 %v2269
    %2486 = vmatpush1.bf16.msra.mxu0 %v2268
    %2487 = vmatprep.subr.bf16.mxu0 %v2273
    %2488 = vmatpush1.bf16.msra.mxu0 %v2272
    %2489 = vmatprep.subr.bf16.mxu0 %v2277
    %2490 = vmatpush1.bf16.msra.mxu0 %v2276
    %2491 = vmatprep.subr.bf16.mxu0 %v2281
    %2492 = vmatpush1.bf16.msra.mxu0 %v2280
    %2493 = vmatprep.subr.bf16.mxu0 %v2285
    %2494 = vmatpush1.bf16.msra.mxu0 %v2284
    %2495 = vmatprep.subr.bf16.mxu0 %v2289
    %2496 = vmatpush1.bf16.msra.mxu0 %v2288
    %2497 = vmatprep.subr.bf16.mxu0 %v2293
    %2498 = vmatpush1.bf16.msra.mxu0 %v2292
    %2499 = vmatprep.subr.bf16.mxu0 %v2297
    %2500 = vmatpush1.bf16.msra.mxu0 %v2296
    %2501 = vmatprep.mubr.bf16.mxu0 %v1783
    %2502 = vmatmul.mubr.bf16.gmra.mrb[0].mxu0 %v1782
    %v2503 = vpop.f32.mrb[0].mxu0
    %v2504 = vadd.f32 %v2463, %v2503
    %v2505 = vpop.f32.mrb[0].mxu0
    %v2506 = vadd.f32 %v2465, %v2505
    %v2507 = vpop.f32.mrb[0].mxu0
    %v2508 = vpop.f32.mrb[0].mxu0
    %2509 = vdwg.mxu0
    %2510 = vmatprep.subr.bf16.mxu0 %v2175
    %2511 = vmatpush1.bf16.msra.mxu0 %v2174
    %2512 = vmatprep.subr.bf16.mxu0 %v2179
    %2513 = vmatpush1.bf16.msra.mxu0 %v2178
    %2514 = vmatprep.subr.bf16.mxu0 %v2183
    %2515 = vmatpush1.bf16.msra.mxu0 %v2182
    %2516 = vmatprep.subr.bf16.mxu0 %v2187
    %2517 = vmatpush1.bf16.msra.mxu0 %v2186
    %2518 = vmatprep.subr.bf16.mxu0 %v2191
    %2519 = vmatpush1.bf16.msra.mxu0 %v2190
    %2520 = vmatprep.subr.bf16.mxu0 %v2195
    %2521 = vmatpush1.bf16.msra.mxu0 %v2194
    %2522 = vmatprep.subr.bf16.mxu0 %v2199
    %2523 = vmatpush1.bf16.msra.mxu0 %v2198
    %2524 = vmatprep.subr.bf16.mxu0 %v2203
    %2525 = vmatpush1.bf16.msra.mxu0 %v2202
    %2526 = vmatprep.subr.bf16.mxu0 %v2207
    %2527 = vmatpush1.bf16.msra.mxu0 %v2206
    %2528 = vmatprep.subr.bf16.mxu0 %v2211
    %2529 = vmatpush1.bf16.msra.mxu0 %v2210
    %2530 = vmatprep.subr.bf16.mxu0 %v2215
    %2531 = vmatpush1.bf16.msra.mxu0 %v2214
    %2532 = vmatprep.subr.bf16.mxu0 %v2219
    %2533 = vmatpush1.bf16.msra.mxu0 %v2218
    %2534 = vmatprep.subr.bf16.mxu0 %v2223
    %2535 = vmatpush1.bf16.msra.mxu0 %v2222
    %2536 = vmatprep.subr.bf16.mxu0 %v2227
    %2537 = vmatpush1.bf16.msra.mxu0 %v2226
    %2538 = vmatprep.subr.bf16.mxu0 %v2231
    %2539 = vmatpush1.bf16.msra.mxu0 %v2230
    %2540 = vmatprep.subr.bf16.mxu0 %v2235
    %2541 = vmatpush1.bf16.msra.mxu0 %v2234
    %2542 = vmatprep.mubr.bf16.mxu0 %v1781
    %2543 = vmatmul.mubr.bf16.gmra.mrb[0].mxu0 %v1780
    %v2544 = vpop.f32.mrb[0].mxu0
    %v2545 = vadd.f32 %v1765, %v2544
    %v2546 = vpop.f32.mrb[0].mxu0
    %v2547 = vadd.f32 %v1769, %v2546
    %v2548 = vpop.f32.mrb[0].mxu0
    %v2549 = vpop.f32.mrb[0].mxu0
    %2550 = vdwg.mxu0
    %2551 = vmatprep.subr.bf16.mxu0 %v2239
    %2552 = vmatpush1.bf16.msra.mxu0 %v2238
    %2553 = vmatprep.subr.bf16.mxu0 %v2243
    %2554 = vmatpush1.bf16.msra.mxu0 %v2242
    %2555 = vmatprep.subr.bf16.mxu0 %v2247
    %2556 = vmatpush1.bf16.msra.mxu0 %v2246
    %2557 = vmatprep.subr.bf16.mxu0 %v2251
    %2558 = vmatpush1.bf16.msra.mxu0 %v2250
    %2559 = vmatprep.subr.bf16.mxu0 %v2255
    %2560 = vmatpush1.bf16.msra.mxu0 %v2254
    %2561 = vmatprep.subr.bf16.mxu0 %v2259
    %2562 = vmatpush1.bf16.msra.mxu0 %v2258
    %2563 = vmatprep.subr.bf16.mxu0 %v2263
    %2564 = vmatpush1.bf16.msra.mxu0 %v2262
    %2565 = vmatprep.subr.bf16.mxu0 %v2267
    %2566 = vmatpush1.bf16.msra.mxu0 %v2266
    %2567 = vmatprep.subr.bf16.mxu0 %v2271
    %2568 = vmatpush1.bf16.msra.mxu0 %v2270
    %2569 = vmatprep.subr.bf16.mxu0 %v2275
    %2570 = vmatpush1.bf16.msra.mxu0 %v2274
    %2571 = vmatprep.subr.bf16.mxu0 %v2279
    %2572 = vmatpush1.bf16.msra.mxu0 %v2278
    %2573 = vmatprep.subr.bf16.mxu0 %v2283
    %2574 = vmatpush1.bf16.msra.mxu0 %v2282
    %2575 = vmatprep.subr.bf16.mxu0 %v2287
    %2576 = vmatpush1.bf16.msra.mxu0 %v2286
    %2577 = vmatprep.subr.bf16.mxu0 %v2291
    %2578 = vmatpush1.bf16.msra.mxu0 %v2290
    %2579 = vmatprep.subr.bf16.mxu0 %v2295
    %2580 = vmatpush1.bf16.msra.mxu0 %v2294
    %2581 = vmatprep.subr.bf16.mxu0 %v2299
    %2582 = vmatpush1.bf16.msra.mxu0 %v2298
    %2583 = vmatprep.mubr.bf16.mxu0 %v1783
    %2584 = vmatmul.mubr.bf16.gmra.mrb[0].mxu0 %v1782
    %v2585 = vpop.f32.mrb[0].mxu0
    %v2586 = vadd.f32 %v2545, %v2585
    %v2587 = vpop.f32.mrb[0].mxu0
    %v2588 = vadd.f32 %v2547, %v2587
    %v2589 = vpop.f32.mrb[0].mxu0
    %v2590 = vpop.f32.mrb[0].mxu0
    %2591 = vdwg.mxu0
    %v2592 = vmax.f32 %v2504, 0.0
    %v2593 = vmax.f32 %v2506, 0.0
    %v2594 = vmax.f32 %v2586, 0.0
    %v2595 = vmax.f32 %v2588, 0.0
    %v2596 = vpack.c.bf16 %v2592, %v2592
    %v2597 = vpack.c.bf16 %v2593, %v2593
    %v2598 = vpack.c.bf16 %v2594, %v2594
    %v2599 = vpack.c.bf16 %v2595, %v2595
    %v2604 = vunpack.c.l.b16 %v2596
    %v2605 = vunpack.c.l.b16 %v2597
    %v2606 = vunpack.c.l.b16 %v2598
    %v2607 = vunpack.c.l.b16 %v2599
    %v2608 = vpack.c.b16 %v2605, %v2604
    %v2609 = vpack.c.b16 %v2607, %v2606
    %2612 = vst [vmem:[#allocation2] sm:$0xff] %v2608
    %2613 = vst [vmem:[#allocation2 + $0x8] sm:$0xff] %v2609
    %v2614 = vld [vmem:[#allocation2] sm:$0xff]
    %v2615 = vld [vmem:[#allocation2 + $0x8] sm:$0xff]
    %v2616 = vld [vmem:[%s5] sm:$0xf]
    %v2617 = vld [vmem:[%s5 + $0x4] sm:$0xf]
    %v2618 = vld [vmem:[%s5 + $0x8] sm:$0xf]
    %v2619 = vld [vmem:[%s5 + $0xc] sm:$0xf]
    %v2620 = vld [vmem:[%s5 + $0x10] sm:$0xf]
    %v2621 = vld [vmem:[%s5 + $0x14] sm:$0xf]
    %v2622 = vld [vmem:[%s5 + $0x18] sm:$0xf]
    %v2623 = vld [vmem:[%s5 + $0x1c] sm:$0xf]
    %v2624 = vld [vmem:[%s5 + $0x20] sm:$0xf]
    %v2625 = vld [vmem:[%s5 + $0x24] sm:$0xf]
    %v2626 = vld [vmem:[%s5 + $0x28] sm:$0xf]
    %v2627 = vld [vmem:[%s5 + $0x2c] sm:$0xf]
    %v2628 = vld [vmem:[%s5 + $0x30] sm:$0xf]
    %v2629 = vld [vmem:[%s5 + $0x34] sm:$0xf]
    %v2630 = vld [vmem:[%s5 + $0x38] sm:$0xf]
    %v2631 = vld [vmem:[%s5 + $0x3c] sm:$0xf]
    %v2632 = vld [vmem:[%s5 + $0x40] sm:$0xf]
    %v2633 = vld [vmem:[%s5 + $0x44] sm:$0xf]
    %v2634 = vld [vmem:[%s5 + $0x48] sm:$0xf]
    %v2635 = vld [vmem:[%s5 + $0x4c] sm:$0xf]
    %v2636 = vld [vmem:[%s5 + $0x50] sm:$0xf]
    %v2637 = vld [vmem:[%s5 + $0x54] sm:$0xf]
    %v2638 = vld [vmem:[%s5 + $0x58] sm:$0xf]
    %v2639 = vld [vmem:[%s5 + $0x5c] sm:$0xf]
    %v2640 = vld [vmem:[%s5 + $0x60] sm:$0xf]
    %v2641 = vld [vmem:[%s5 + $0x64] sm:$0xf]
    %v2642 = vld [vmem:[%s5 + $0x68] sm:$0xf]
    %v2643 = vld [vmem:[%s5 + $0x6c] sm:$0xf]
    %v2644 = vld [vmem:[%s5 + $0x70] sm:$0xf]
    %v2645 = vld [vmem:[%s5 + $0x74] sm:$0xf]
    %v2646 = vld [vmem:[%s5 + $0x78] sm:$0xf]
    %v2647 = vld [vmem:[%s5 + $0x7c] sm:$0xf]
    %v2648 = vld [vmem:[%s5 + $0x80] sm:$0xf]
    %v2649 = vld [vmem:[%s5 + $0x84] sm:$0xf]
    %v2650 = vld [vmem:[%s5 + $0x88] sm:$0xf]
    %v2651 = vld [vmem:[%s5 + $0x8c] sm:$0xf]
    %v2652 = vld [vmem:[%s5 + $0x90] sm:$0xf]
    %v2653 = vld [vmem:[%s5 + $0x94] sm:$0xf]
    %v2654 = vld [vmem:[%s5 + $0x98] sm:$0xf]
    %v2655 = vld [vmem:[%s5 + $0x9c] sm:$0xf]
    %v2656 = vld [vmem:[%s5 + $0xa0] sm:$0xf]
    %v2657 = vld [vmem:[%s5 + $0xa4] sm:$0xf]
    %v2658 = vld [vmem:[%s5 + $0xa8] sm:$0xf]
    %v2659 = vld [vmem:[%s5 + $0xac] sm:$0xf]
    %v2660 = vld [vmem:[%s5 + $0xb0] sm:$0xf]
    %v2661 = vld [vmem:[%s5 + $0xb4] sm:$0xf]
    %v2662 = vld [vmem:[%s5 + $0xb8] sm:$0xf]
    %v2663 = vld [vmem:[%s5 + $0xbc] sm:$0xf]
    %v2664 = vld [vmem:[%s5 + $0xc0] sm:$0xf]
    %v2665 = vld [vmem:[%s5 + $0xc4] sm:$0xf]
    %v2666 = vld [vmem:[%s5 + $0xc8] sm:$0xf]
    %v2667 = vld [vmem:[%s5 + $0xcc] sm:$0xf]
    %v2668 = vld [vmem:[%s5 + $0xd0] sm:$0xf]
    %v2669 = vld [vmem:[%s5 + $0xd4] sm:$0xf]
    %v2670 = vld [vmem:[%s5 + $0xd8] sm:$0xf]
    %v2671 = vld [vmem:[%s5 + $0xdc] sm:$0xf]
    %v2672 = vld [vmem:[%s5 + $0xe0] sm:$0xf]
    %v2673 = vld [vmem:[%s5 + $0xe4] sm:$0xf]
    %v2674 = vld [vmem:[%s5 + $0xe8] sm:$0xf]
    %v2675 = vld [vmem:[%s5 + $0xec] sm:$0xf]
    %v2676 = vld [vmem:[%s5 + $0xf0] sm:$0xf]
    %v2677 = vld [vmem:[%s5 + $0xf4] sm:$0xf]
    %v2678 = vld [vmem:[%s5 + $0xf8] sm:$0xf]
    %v2679 = vld [vmem:[%s5 + $0xfc] sm:$0xf]
    %v2680 = vld [vmem:[%s6] sm:$0x1]
    %v2682 = vlaneseq
    %v2683 = vshrl.u32 %v2682, 7
    %v2684 = vsub.s32 0, %v2683
    %v2685 = vrot.slane %v2680, %v2684
    %v2689 = vunpack.c.l.b16 %v2614
    %v2690 = vunpack.c.h.b16 %v2614
    %v2691 = vunpack.c.l.b16 %v2615
    %v2692 = vunpack.c.h.b16 %v2615
    %v2693 = vpack.c.b16 %v2689, %v2689
    %v2694 = vpack.c.b16 %v2690, %v2690
    %v2695 = vpack.c.b16 %v2691, %v2691
    %v2696 = vpack.c.b16 %v2692, %v2692
    %v2765 = vunpack.c.l.b16 %v2616
    %v2766 = vunpack.c.l.b16 %v2617
    %v2767 = vunpack.c.l.b16 %v2618
    %v2768 = vunpack.c.l.b16 %v2619
    %v2769 = vunpack.c.l.b16 %v2620
    %v2770 = vunpack.c.l.b16 %v2621
    %v2771 = vunpack.c.l.b16 %v2622
    %v2772 = vunpack.c.l.b16 %v2623
    %v2773 = vunpack.c.l.b16 %v2624
    %v2774 = vunpack.c.l.b16 %v2625
    %v2775 = vunpack.c.l.b16 %v2626
    %v2776 = vunpack.c.l.b16 %v2627
    %v2777 = vunpack.c.l.b16 %v2628
    %v2778 = vunpack.c.l.b16 %v2629
    %v2779 = vunpack.c.l.b16 %v2630
    %v2780 = vunpack.c.l.b16 %v2631
    %v2781 = vunpack.c.l.b16 %v2632
    %v2782 = vunpack.c.l.b16 %v2633
    %v2783 = vunpack.c.l.b16 %v2634
    %v2784 = vunpack.c.l.b16 %v2635
    %v2785 = vunpack.c.l.b16 %v2636
    %v2786 = vunpack.c.l.b16 %v2637
    %v2787 = vunpack.c.l.b16 %v2638
    %v2788 = vunpack.c.l.b16 %v2639
    %v2789 = vunpack.c.l.b16 %v2640
    %v2790 = vunpack.c.l.b16 %v2641
    %v2791 = vunpack.c.l.b16 %v2642
    %v2792 = vunpack.c.l.b16 %v2643
    %v2793 = vunpack.c.l.b16 %v2644
    %v2794 = vunpack.c.l.b16 %v2645
    %v2795 = vunpack.c.l.b16 %v2646
    %v2796 = vunpack.c.l.b16 %v2647
    %v2797 = vunpack.c.l.b16 %v2648
    %v2798 = vunpack.c.l.b16 %v2649
    %v2799 = vunpack.c.l.b16 %v2650
    %v2800 = vunpack.c.l.b16 %v2651
    %v2801 = vunpack.c.l.b16 %v2652
    %v2802 = vunpack.c.l.b16 %v2653
    %v2803 = vunpack.c.l.b16 %v2654
    %v2804 = vunpack.c.l.b16 %v2655
    %v2805 = vunpack.c.l.b16 %v2656
    %v2806 = vunpack.c.l.b16 %v2657
    %v2807 = vunpack.c.l.b16 %v2658
    %v2808 = vunpack.c.l.b16 %v2659
    %v2809 = vunpack.c.l.b16 %v2660
    %v2810 = vunpack.c.l.b16 %v2661
    %v2811 = vunpack.c.l.b16 %v2662
    %v2812 = vunpack.c.l.b16 %v2663
    %v2813 = vunpack.c.l.b16 %v2664
    %v2814 = vunpack.c.l.b16 %v2665
    %v2815 = vunpack.c.l.b16 %v2666
    %v2816 = vunpack.c.l.b16 %v2667
    %v2817 = vunpack.c.l.b16 %v2668
    %v2818 = vunpack.c.l.b16 %v2669
    %v2819 = vunpack.c.l.b16 %v2670
    %v2820 = vunpack.c.l.b16 %v2671
    %v2821 = vunpack.c.l.b16 %v2672
    %v2822 = vunpack.c.l.b16 %v2673
    %v2823 = vunpack.c.l.b16 %v2674
    %v2824 = vunpack.c.l.b16 %v2675
    %v2825 = vunpack.c.l.b16 %v2676
    %v2826 = vunpack.c.l.b16 %v2677
    %v2827 = vunpack.c.l.b16 %v2678
    %v2828 = vunpack.c.l.b16 %v2679
    %v2829 = vpack.c.b16 %v2766, %v2765
    %v2830 = vpack.c.b16 %v2768, %v2767
    %v2831 = vpack.c.b16 %v2770, %v2769
    %v2832 = vpack.c.b16 %v2772, %v2771
    %v2833 = vpack.c.b16 %v2774, %v2773
    %v2834 = vpack.c.b16 %v2776, %v2775
    %v2835 = vpack.c.b16 %v2778, %v2777
    %v2836 = vpack.c.b16 %v2780, %v2779
    %v2837 = vpack.c.b16 %v2782, %v2781
    %v2838 = vpack.c.b16 %v2784, %v2783
    %v2839 = vpack.c.b16 %v2786, %v2785
    %v2840 = vpack.c.b16 %v2788, %v2787
    %v2841 = vpack.c.b16 %v2790, %v2789
    %v2842 = vpack.c.b16 %v2792, %v2791
    %v2843 = vpack.c.b16 %v2794, %v2793
    %v2844 = vpack.c.b16 %v2796, %v2795
    %v2845 = vpack.c.b16 %v2798, %v2797
    %v2846 = vpack.c.b16 %v2800, %v2799
    %v2847 = vpack.c.b16 %v2802, %v2801
    %v2848 = vpack.c.b16 %v2804, %v2803
    %v2849 = vpack.c.b16 %v2806, %v2805
    %v2850 = vpack.c.b16 %v2808, %v2807
    %v2851 = vpack.c.b16 %v2810, %v2809
    %v2852 = vpack.c.b16 %v2812, %v2811
    %v2853 = vpack.c.b16 %v2814, %v2813
    %v2854 = vpack.c.b16 %v2816, %v2815
    %v2855 = vpack.c.b16 %v2818, %v2817
    %v2856 = vpack.c.b16 %v2820, %v2819
    %v2857 = vpack.c.b16 %v2822, %v2821
    %v2858 = vpack.c.b16 %v2824, %v2823
    %v2859 = vpack.c.b16 %v2826, %v2825
    %v2860 = vpack.c.b16 %v2828, %v2827
    %2893 = vmatprep.subr.bf16.mxu0 0
    %2894 = vmatpush1.bf16.msra.mxu0 %v2829
    %2895 = vmatprep.subr.bf16.mxu0 0
    %2896 = vmatpush1.bf16.msra.mxu0 %v2830
    %2897 = vmatprep.subr.bf16.mxu0 0
    %2898 = vmatpush1.bf16.msra.mxu0 %v2831
    %2899 = vmatprep.subr.bf16.mxu0 0
    %2900 = vmatpush1.bf16.msra.mxu0 %v2832
    %2901 = vmatprep.subr.bf16.mxu0 0
    %2902 = vmatpush1.bf16.msra.mxu0 %v2833
    %2903 = vmatprep.subr.bf16.mxu0 0
    %2904 = vmatpush1.bf16.msra.mxu0 %v2834
    %2905 = vmatprep.subr.bf16.mxu0 0
    %2906 = vmatpush1.bf16.msra.mxu0 %v2835
    %2907 = vmatprep.subr.bf16.mxu0 0
    %2908 = vmatpush1.bf16.msra.mxu0 %v2836
    %2909 = vmatprep.subr.bf16.mxu0 0
    %2910 = vmatpush1.bf16.msra.mxu0 %v2837
    %2911 = vmatprep.subr.bf16.mxu0 0
    %2912 = vmatpush1.bf16.msra.mxu0 %v2838
    %2913 = vmatprep.subr.bf16.mxu0 0
    %2914 = vmatpush1.bf16.msra.mxu0 %v2839
    %2915 = vmatprep.subr.bf16.mxu0 0
    %2916 = vmatpush1.bf16.msra.mxu0 %v2840
    %2917 = vmatprep.subr.bf16.mxu0 0
    %2918 = vmatpush1.bf16.msra.mxu0 %v2841
    %2919 = vmatprep.subr.bf16.mxu0 0
    %2920 = vmatpush1.bf16.msra.mxu0 %v2842
    %2921 = vmatprep.subr.bf16.mxu0 0
    %2922 = vmatpush1.bf16.msra.mxu0 %v2843
    %2923 = vmatprep.subr.bf16.mxu0 0
    %2924 = vmatpush1.bf16.msra.mxu0 %v2844
    %2925 = vmatprep.mubr.bf16.mxu0 %v2694
    %2926 = vmatmul.mubr.bf16.gmra.mrb[0].mxu0 %v2693
    %v2927 = vpop.f32.mrb[0].mxu0
    %v2928 = vadd.f32 %v2685, %v2927
    %v2929 = vpop.f32.mrb[0].mxu0
    %v2930 = vpop.f32.mrb[0].mxu0
    %v2931 = vpop.f32.mrb[0].mxu0
    %2932 = vdwg.mxu0
    %2933 = vmatprep.subr.bf16.mxu0 0
    %2934 = vmatpush1.bf16.msra.mxu0 %v2845
    %2935 = vmatprep.subr.bf16.mxu0 0
    %2936 = vmatpush1.bf16.msra.mxu0 %v2846
    %2937 = vmatprep.subr.bf16.mxu0 0
    %2938 = vmatpush1.bf16.msra.mxu0 %v2847
    %2939 = vmatprep.subr.bf16.mxu0 0
    %2940 = vmatpush1.bf16.msra.mxu0 %v2848
    %2941 = vmatprep.subr.bf16.mxu0 0
    %2942 = vmatpush1.bf16.msra.mxu0 %v2849
    %2943 = vmatprep.subr.bf16.mxu0 0
    %2944 = vmatpush1.bf16.msra.mxu0 %v2850
    %2945 = vmatprep.subr.bf16.mxu0 0
    %2946 = vmatpush1.bf16.msra.mxu0 %v2851
    %2947 = vmatprep.subr.bf16.mxu0 0
    %2948 = vmatpush1.bf16.msra.mxu0 %v2852
    %2949 = vmatprep.subr.bf16.mxu0 0
    %2950 = vmatpush1.bf16.msra.mxu0 %v2853
    %2951 = vmatprep.subr.bf16.mxu0 0
    %2952 = vmatpush1.bf16.msra.mxu0 %v2854
    %2953 = vmatprep.subr.bf16.mxu0 0
    %2954 = vmatpush1.bf16.msra.mxu0 %v2855
    %2955 = vmatprep.subr.bf16.mxu0 0
    %2956 = vmatpush1.bf16.msra.mxu0 %v2856
    %2957 = vmatprep.subr.bf16.mxu0 0
    %2958 = vmatpush1.bf16.msra.mxu0 %v2857
    %2959 = vmatprep.subr.bf16.mxu0 0
    %2960 = vmatpush1.bf16.msra.mxu0 %v2858
    %2961 = vmatprep.subr.bf16.mxu0 0
    %2962 = vmatpush1.bf16.msra.mxu0 %v2859
    %2963 = vmatprep.subr.bf16.mxu0 0
    %2964 = vmatpush1.bf16.msra.mxu0 %v2860
    %2965 = vmatprep.mubr.bf16.mxu0 %v2696
    %2966 = vmatmul.mubr.bf16.gmra.mrb[0].mxu0 %v2695
    %v2967 = vpop.f32.mrb[0].mxu0
    %v2968 = vadd.f32 %v2928, %v2967
    %v2969 = vpop.f32.mrb[0].mxu0
    %v2970 = vpop.f32.mrb[0].mxu0
    %v2971 = vpop.f32.mrb[0].mxu0
    %2972 = vdwg.mxu0
    %2973 = vst [vmem:[#allocation8] sm:$0xff] %v2968
    // Predicated region
    $region38: #{mnist_mlp_forward.1} parent=1 // pred_check
      _
    $region39: #{mnist_mlp_forward.1} parent=1 // pred_check_branch
      %2975 = sbr.rel (0) target = $region41
    $region40: #{mnist_mlp_forward.1} parent=1 // pred_region
      %s2977 = ssub.s32 128, 128
      %2978 = vsyncadd [#allocation5], %s2977
      %s2980 = sshll.u32 [#allocation8], 4
      %s2981 = int_to_ptr.vmem [resolvable:$true] %s2980
      %2983 = dma.vmem_to_hbm [thread:$0]  %s2981, 128, %s7, [#allocation5]
    $region41: #{mnist_mlp_forward.1} parent=1 // pred_fallthru
      _
    // Predicated region
    $region42: #{mnist_mlp_forward.1} parent=1 // pred_check
      _
    $region43: #{mnist_mlp_forward.1} parent=1 // pred_check_branch
      %2985 = sbr.rel (0) target = $region45
    $region44: #{mnist_mlp_forward.1} parent=1 // pred_region
      %2986 = dma.done [#allocation5], 128
    $region45: #{mnist_mlp_forward.1} parent=1 // pred_fallthru
      _
    %2987 = vsyncpa [#allocation4], 1
    %2988 = vsyncpa [#allocation7], 1
    %2989 = vsyncpa [#allocation5], 1

</llo_original>
